<compile_context>
chip_gen: v7x
topology: tpu7x:2x2x1
jax: 0.10.0
libtpu: 0.0.40
codegen_flags: <defaults>
</compile_context>

<pallas_src>
import functools

import jax
import jax.numpy as jnp
from jax.experimental import pallas as pl
from jax.experimental.pallas import tpu as pltpu


def _cross_attention_kernel(x_ref, enc_ref,
                            wq_ref, bq_ref,
                            wk_ref, bk_ref,
                            wv_ref, bv_ref,
                            wo_ref, bo_ref,
                            out_ref,
                            k_cache, v_cache,
                            *, n_heads):
    h = n_heads
    tq, d = x_ref.shape
    s = enc_ref.shape[0]
    dh = d // h
    in_dt = x_ref.dtype

    # ---- K/V projection: hoisted out of the T-tile loop.  Computed once per
    #      batch element (first T tile) into persistent head-major VMEM scratch.
    @pl.when(pl.program_id(1) == 0)
    def _():
        enc = enc_ref[...]                                             # (S, D)
        k = jnp.dot(enc, wk_ref[...],
                    preferred_element_type=jnp.float32) + bk_ref[...]  # (S, D) f32
        v = jnp.dot(enc, wv_ref[...],
                    preferred_element_type=jnp.float32) + bv_ref[...]  # (S, D) f32
        k_cache[...] = k.astype(in_dt).reshape(s, h, dh).transpose(1, 0, 2)
        v_cache[...] = v.astype(in_dt).reshape(s, h, dh).transpose(1, 0, 2)

    # ---- Q projection: one dense (tq, D) @ (D, D) matmul (full MXU width).
    #      head_scale is pre-folded into wq/bq on the wrapper side.
    x = x_ref[...]                                                     # (tq, D)
    q = jnp.dot(x, wq_ref[...],
                preferred_element_type=jnp.float32) + bq_ref[...]      # (tq, D) f32
    qh = q.astype(in_dt).reshape(tq, h, dh).transpose(1, 0, 2)         # (H, tq, dh)

    kh = k_cache[...]                                                  # (H, S, dh)
    vh = v_cache[...]                                                  # (H, S, dh)

    # ---- Attention scores + softmax over S (f32 intermediates).
    scores = jnp.einsum('htd,hsd->hts', qh, kh,
                        preferred_element_type=jnp.float32)            # (H, tq, S)
    scores = scores - jnp.max(scores, axis=-1, keepdims=True)
    e = jnp.exp(scores)
    denom = jnp.sum(e, axis=-1, keepdims=True)
    attn = (e * pl.reciprocal(denom, approx=True)).astype(in_dt)       # EUP, not VPU divide

    # ---- Per-head context, interleaved back to (tq, D), then ONE dense output
    #      projection: the cross-head reduction happens inside the MXU contraction.
    ctx = jnp.einsum('hts,hsd->htd', attn, vh,
                     preferred_element_type=jnp.float32)               # (H, tq, dh)
    ctx2d = ctx.astype(in_dt).transpose(1, 0, 2).reshape(tq, d)        # (tq, D) head-blocked
    out = jnp.dot(ctx2d, wo_ref[...],
                  preferred_element_type=jnp.float32) + bo_ref[...]    # (tq, D) f32
    out_ref[...] = out.astype(out_ref.dtype)


def _const_spec(shape):
    """Spec for an operand whose block is constant across the whole grid.

    Single-buffered (pl.Buffered(1)) to halve its VMEM footprint.  The narrow
    TypeError probe only guards BlockSpec construction on builds that lack the
    per-operand pipeline_mode kwarg; kernel compile/runtime errors are never
    swallowed.
    """
    zeros = (0,) * len(shape)
    idx = lambda *_: zeros
    try:
        return pl.BlockSpec(shape, idx, pipeline_mode=pl.Buffered(1))
    except TypeError:
        return pl.BlockSpec(shape, idx)


def cross_attention(x, encoder_output, params, *, n_heads, block_q=None, mask=None):
    """Pallas multi-head cross-attention.

    x:               (B, T, D)
    encoder_output:  (B, S, D)
    params: dict with 'wq','bq','wk','bk','wv','bv','wo','bo'
            weights are (D, D) pre-transposed so y = x @ W + b; biases are (1, D)
    """
    if mask is not None:
        # TODO(synk): optional attention mask not implemented (reference default is None).
        raise NotImplementedError("attention mask is not supported by this kernel")

    B, T, D = x.shape
    S = encoder_output.shape[1]
    H = n_heads
    assert D % H == 0, "dim must be divisible by n_heads"
    dh = D // H
    scale = float(dh) ** -0.5

    # ---- fold head_scale into the Q projection (one-time, wrapper side) ----
    wq = params["wq"] * scale
    bq = params["bq"] * scale
    wk, bk = params["wk"], params["bk"]
    wv, bv = params["wv"], params["bv"]
    wo, bo = params["wo"], params["bo"]

    # ---- generation-aware VMEM cap (v7x: 64 MiB/TC, v5e/v6e: 128 MiB) ----
    try:
        vmem_cap = int(pltpu.get_tpu_info().vmem_capacity_bytes)
    except Exception:
        # Capability probe only (not masking kernel errors): assume the
        # smallest current generation (v7x, 64 MiB per TensorCore).
        vmem_cap = 64 * 2**20

    if block_q is None:
        block_q = 128 if vmem_cap <= 64 * 2**20 else 256

    # ---- T tiling (pad T up to a multiple of the tile if needed) ----
    tq = T if T <= block_q else block_q
    t_pad = -(-T // tq) * tq
    x_in = x if t_pad == T else jnp.pad(x, ((0, 0), (0, t_pad - T), (0, 0)))
    num_t = t_pad // tq

    # ---- VMEM budget: rough working-set estimate, clamped per generation ----
    itemsize = x.dtype.itemsize
    w_item = wq.dtype.itemsize
    dh_pad = -(-dh // 128) * 128            # lane padding of the head-major cache
    s_pad = -(-S // 128) * 128
    w_bytes = (4 * D * D + 4 * D) * w_item                               # single-buffered weights
    io_bytes = (2 * 2 * tq * D + 2 * S * D) * itemsize                   # x/out (double) + enc
    cache_bytes = 2 * H * S * dh_pad * itemsize                          # K/V scratch
    interm_bytes = 4 * (2 * tq * D + 2 * H * tq * s_pad + 2 * H * tq * dh_pad + 2 * S * D)
    working = w_bytes + io_bytes + cache_bytes + interm_bytes
    vmem_limit = int(min(max(int(1.5 * working), 32 * 2**20), int(0.75 * vmem_cap)))

    kernel = functools.partial(_cross_attention_kernel, n_heads=H)

    out = pl.pallas_call(
        kernel,
        out_shape=jax.ShapeDtypeStruct((B, t_pad, D), x.dtype),
        grid_spec=pltpu.PrefetchScalarGridSpec(
            num_scalar_prefetch=0,
            grid=(B, num_t),
            in_specs=[
                pl.BlockSpec((None, tq, D), lambda b, t: (b, t, 0)),     # x tile
                pl.BlockSpec((None, S, D), lambda b, t: (b, 0, 0)),      # encoder_output
                _const_spec((D, D)), _const_spec((1, D)),                # Wq*scale, bq*scale
                _const_spec((D, D)), _const_spec((1, D)),                # Wk, bk
                _const_spec((D, D)), _const_spec((1, D)),                # Wv, bv
                _const_spec((D, D)), _const_spec((1, D)),                # W_proj, b_proj
            ],
            out_specs=pl.BlockSpec((None, tq, D), lambda b, t: (b, t, 0)),
            scratch_shapes=[
                pltpu.VMEM((H, S, dh), x.dtype),                         # K cache (head-major)
                pltpu.VMEM((H, S, dh), x.dtype),                         # V cache (head-major)
            ],
        ),
        compiler_params=pltpu.CompilerParams(
            # B is parallel (megacore sharding on v7x).  T must be "arbitrary":
            # the K/V scratch cache written at t == 0 is read by later T tiles.
            dimension_semantics=("parallel", "arbitrary"),
            vmem_limit_bytes=vmem_limit,
        ),
    )(x_in, encoder_output, wq, bq, wk, bk, wv, bv, wo, bo)

    return out if t_pad == T else out[:, :T, :]


def _reference(x, enc, params, n_heads):
    """Pure-JAX reference mirroring the PyTorch forward (mask=None, dropout=0)."""
    B, T, D = x.shape
    S = enc.shape[1]
    dh = D // n_heads
    scale = dh ** (-0.5)

    q = x @ params["wq"] + params["bq"]
    k = enc @ params["wk"] + params["bk"]
    v = enc @ params["wv"] + params["bv"]

    q = q.reshape(B, T, n_heads, dh).transpose(0, 2, 1, 3)
    k = k.reshape(B, S, n_heads, dh).transpose(0, 2, 1, 3)
    v = v.reshape(B, S, n_heads, dh).transpose(0, 2, 1, 3)

    scores = jnp.einsum("bhtd,bhsd->bhts", q, k) * scale
    attn = jax.nn.softmax(scores, axis=-1)
    ctx = jnp.einsum("bhts,bhsd->bhtd", attn, v)
    ctx = ctx.transpose(0, 2, 1, 3).reshape(B, T, D)
    return ctx @ params["wo"] + params["bo"]


if __name__ == "__main__":
    B, T, S, D, H = 2, 8, 16, 32, 4

    key = jax.random.PRNGKey(0)
    keys = jax.random.split(key, 10)
    bound = 1.0 / (D ** 0.5)  # mimic nn.Linear default init scale

    params = {
        "wq": jax.random.uniform(keys[0], (D, D), jnp.float32, -bound, bound),
        "bq": jax.random.uniform(keys[1], (1, D), jnp.float32, -bound, bound),
        "wk": jax.random.uniform(keys[2], (D, D), jnp.float32, -bound, bound),
        "bk": jax.random.uniform(keys[3], (1, D), jnp.float32, -bound, bound),
        "wv": jax.random.uniform(keys[4], (D, D), jnp.float32, -bound, bound),
        "bv": jax.random.uniform(keys[5], (1, D), jnp.float32, -bound, bound),
        "wo": jax.random.uniform(keys[6], (D, D), jnp.float32, -bound, bound),
        "bo": jax.random.uniform(keys[7], (1, D), jnp.float32, -bound, bound),
    }

    x = jax.random.normal(keys[8], (B, T, D), jnp.float32)
    enc = jax.random.normal(keys[9], (B, S, D), jnp.float32)

    out = cross_attention(x, enc, params, n_heads=H)
    out = jax.block_until_ready(out)

    ref = _reference(x, enc, params, H)
    assert out.shape == (B, T, D)
    # Tolerance accommodates the EUP approximate-reciprocal softmax.
    assert jnp.allclose(out, ref, atol=1e-2, rtol=1e-2), "mismatch vs reference"

    print("KERNEL_OK")
</pallas_src>

<mosaic_0001>
module attributes {stable_mosaic.version = 11 : i64} {
  func.func @_cross_attention_kernel(%arg0: i32, %arg1: i32, %arg2: memref<1x8x32xf32, #tpu.memory_space<vmem>>, %arg3: memref<1x16x32xf32, #tpu.memory_space<vmem>>, %arg4: memref<32x32xf32, #tpu.memory_space<vmem>>, %arg5: memref<1x32xf32, #tpu.memory_space<vmem>>, %arg6: memref<32x32xf32, #tpu.memory_space<vmem>>, %arg7: memref<1x32xf32, #tpu.memory_space<vmem>>, %arg8: memref<32x32xf32, #tpu.memory_space<vmem>>, %arg9: memref<1x32xf32, #tpu.memory_space<vmem>>, %arg10: memref<32x32xf32, #tpu.memory_space<vmem>>, %arg11: memref<1x32xf32, #tpu.memory_space<vmem>>, %arg12: memref<1x8x32xf32, #tpu.memory_space<vmem>>, %arg13: memref<4x16x8xf32, #tpu.memory_space<vmem>>, %arg14: memref<4x16x8xf32, #tpu.memory_space<vmem>>) attributes {dimension_semantics = [#tpu.dimension_semantics<parallel>, #tpu.dimension_semantics<arbitrary>], iteration_bounds = array<i64: 2, 1>, scalar_prefetch = 0 : i64, scratch_operands = 2 : i64, tpu.core_type = #tpu.core_type<tc>, window_params = [{transform_indices = @transform_0, window_bounds = array<i64: 1, 8, 32>}, {transform_indices = @transform_1, window_bounds = array<i64: 1, 16, 32>}, {pipeline_mode = #tpu.pipeline_mode<synchronous>, transform_indices = @transform_2, window_bounds = array<i64: 32, 32>}, {pipeline_mode = #tpu.pipeline_mode<synchronous>, transform_indices = @transform_3, window_bounds = array<i64: 1, 32>}, {pipeline_mode = #tpu.pipeline_mode<synchronous>, transform_indices = @transform_4, window_bounds = array<i64: 32, 32>}, {pipeline_mode = #tpu.pipeline_mode<synchronous>, transform_indices = @transform_5, window_bounds = array<i64: 1, 32>}, {pipeline_mode = #tpu.pipeline_mode<synchronous>, transform_indices = @transform_6, window_bounds = array<i64: 32, 32>}, {pipeline_mode = #tpu.pipeline_mode<synchronous>, transform_indices = @transform_7, window_bounds = array<i64: 1, 32>}, {pipeline_mode = #tpu.pipeline_mode<synchronous>, transform_indices = @transform_8, window_bounds = array<i64: 32, 32>}, {pipeline_mode = #tpu.pipeline_mode<synchronous>, transform_indices = @transform_9, window_bounds = array<i64: 1, 32>}, {transform_indices = @transform_10, window_bounds = array<i64: 1, 8, 32>}]} {
    %c0_i32 = arith.constant 0 : i32
    %0 = arith.cmpi eq, %arg1, %c0_i32 : i32
    %1 = arith.extui %0 : i1 to i32
    %c0_i32_0 = arith.constant 0 : i32
    %2 = arith.cmpi ne, %1, %c0_i32_0 : i32
    scf.if %2 {
      %c0_25 = arith.constant 0 : index
      %c0_26 = arith.constant 0 : index
      %c0_27 = arith.constant 0 : index
      %36 = vector.load %arg3[%c0_25, %c0_26, %c0_27] : memref<1x16x32xf32, #tpu.memory_space<vmem>>, vector<1x16x32xf32>
      %37 = vector.shape_cast %36 : vector<1x16x32xf32> to vector<16x32xf32>
      %c0_28 = arith.constant 0 : index
      %c0_29 = arith.constant 0 : index
      %38 = vector.load %arg6[%c0_28, %c0_29] : memref<32x32xf32, #tpu.memory_space<vmem>>, vector<32x32xf32>
      %cst_30 = arith.constant dense<0.000000e+00> : vector<16x32xf32>
      %39 = tpu.matmul %37, %38, %cst_30 {dimension_numbers = #tpu.dot_dimension_numbers<[1], [0], [0], [1], [0, 0, 1, 1], [], []>} : vector<16x32xf32>, vector<32x32xf32>, vector<16x32xf32> -> vector<16x32xf32>
      %c0_31 = arith.constant 0 : index
      %c0_32 = arith.constant 0 : index
      %40 = vector.load %arg7[%c0_31, %c0_32] : memref<1x32xf32, #tpu.memory_space<vmem>>, vector<1x32xf32>
      %41 = vector.broadcast %40 : vector<1x32xf32> to vector<16x32xf32>
      %42 = arith.addf %39, %41 : vector<16x32xf32>
      %c0_33 = arith.constant 0 : index
      %c0_34 = arith.constant 0 : index
      %43 = vector.load %arg8[%c0_33, %c0_34] : memref<32x32xf32, #tpu.memory_space<vmem>>, vector<32x32xf32>
      %cst_35 = arith.constant dense<0.000000e+00> : vector<16x32xf32>
      %44 = tpu.matmul %37, %43, %cst_35 {dimension_numbers = #tpu.dot_dimension_numbers<[1], [0], [0], [1], [0, 0, 1, 1], [], []>} : vector<16x32xf32>, vector<32x32xf32>, vector<16x32xf32> -> vector<16x32xf32>
      %c0_36 = arith.constant 0 : index
      %c0_37 = arith.constant 0 : index
      %45 = vector.load %arg9[%c0_36, %c0_37] : memref<1x32xf32, #tpu.memory_space<vmem>>, vector<1x32xf32>
      %46 = vector.broadcast %45 : vector<1x32xf32> to vector<16x32xf32>
      %47 = arith.addf %44, %46 : vector<16x32xf32>
      %48 = vector.shape_cast %42 : vector<16x32xf32> to vector<16x4x8xf32>
      %49 = tpu.transpose %48, [1, 0, 2] : vector<16x4x8xf32> -> vector<4x16x8xf32>
      %c0_38 = arith.constant 0 : index
      %c0_39 = arith.constant 0 : index
      %c0_40 = arith.constant 0 : index
      %50 = vector.load %arg13[%c0_38, %c0_39, %c0_40] : memref<4x16x8xf32, #tpu.memory_space<vmem>>, vector<4x16x8xf32>
      tpu.vector_store %arg13[%c0_38, %c0_39, %c0_40], %49 {strides = array<i32>} : memref<4x16x8xf32, #tpu.memory_space<vmem>>, vector<4x16x8xf32>,
      %51 = vector.shape_cast %47 : vector<16x32xf32> to vector<16x4x8xf32>
      %52 = tpu.transpose %51, [1, 0, 2] : vector<16x4x8xf32> -> vector<4x16x8xf32>
      %c0_41 = arith.constant 0 : index
      %c0_42 = arith.constant 0 : index
      %c0_43 = arith.constant 0 : index
      %53 = vector.load %arg14[%c0_41, %c0_42, %c0_43] : memref<4x16x8xf32, #tpu.memory_space<vmem>>, vector<4x16x8xf32>
      tpu.vector_store %arg14[%c0_41, %c0_42, %c0_43], %52 {strides = array<i32>} : memref<4x16x8xf32, #tpu.memory_space<vmem>>, vector<4x16x8xf32>,
    } else {
    }
    %c0 = arith.constant 0 : index
    %c0_1 = arith.constant 0 : index
    %c0_2 = arith.constant 0 : index
    %3 = vector.load %arg2[%c0, %c0_1, %c0_2] : memref<1x8x32xf32, #tpu.memory_space<vmem>>, vector<1x8x32xf32>
    %4 = vector.shape_cast %3 : vector<1x8x32xf32> to vector<8x32xf32>
    %c0_3 = arith.constant 0 : index
    %c0_4 = arith.constant 0 : index
    %5 = vector.load %arg4[%c0_3, %c0_4] : memref<32x32xf32, #tpu.memory_space<vmem>>, vector<32x32xf32>
    %cst = arith.constant dense<0.000000e+00> : vector<8x32xf32>
    %6 = tpu.matmul %4, %5, %cst {dimension_numbers = #tpu.dot_dimension_numbers<[1], [0], [0], [1], [0, 0, 1, 1], [], []>} : vector<8x32xf32>, vector<32x32xf32>, vector<8x32xf32> -> vector<8x32xf32>
    %c0_5 = arith.constant 0 : index
    %c0_6 = arith.constant 0 : index
    %7 = vector.load %arg5[%c0_5, %c0_6] : memref<1x32xf32, #tpu.memory_space<vmem>>, vector<1x32xf32>
    %8 = vector.broadcast %7 : vector<1x32xf32> to vector<8x32xf32>
    %9 = arith.addf %6, %8 : vector<8x32xf32>
    %10 = vector.shape_cast %9 : vector<8x32xf32> to vector<8x4x8xf32>
    %11 = tpu.transpose %10, [1, 0, 2] : vector<8x4x8xf32> -> vector<4x8x8xf32>
    %c0_7 = arith.constant 0 : index
    %c0_8 = arith.constant 0 : index
    %c0_9 = arith.constant 0 : index
    %12 = vector.load %arg13[%c0_7, %c0_8, %c0_9] : memref<4x16x8xf32, #tpu.memory_space<vmem>>, vector<4x16x8xf32>
    %c0_10 = arith.constant 0 : index
    %c0_11 = arith.constant 0 : index
    %c0_12 = arith.constant 0 : index
    %13 = vector.load %arg14[%c0_10, %c0_11, %c0_12] : memref<4x16x8xf32, #tpu.memory_space<vmem>>, vector<4x16x8xf32>
    "tpu.trace_start"() <{level = 10 : i32, message = "htd,hsd->hts"}> : () -> ()
    %cst_13 = arith.constant dense<0.000000e+00> : vector<4x8x16xf32>
    %14 = tpu.matmul %11, %12, %cst_13 {dimension_numbers = #tpu.dot_dimension_numbers<[2], [2], [1], [1], [0, 0, 0, 1, 1, 1], [0], [0]>} : vector<4x8x8xf32>, vector<4x16x8xf32>, vector<4x8x16xf32> -> vector<4x8x16xf32>
    "tpu.trace_stop"() : () -> ()
    %cst_14 = arith.constant dense<0xFF800000> : vector<4x8xf32>
    %15 = vector.multi_reduction <maximumf>, %14, %cst_14 [2] : vector<4x8x16xf32> to vector<4x8xf32>
    %16 = vector.shape_cast %15 : vector<4x8xf32> to vector<4x8x1xf32>
    %17 = vector.broadcast %16 : vector<4x8x1xf32> to vector<4x8x16xf32>
    %18 = arith.subf %14, %17 : vector<4x8x16xf32>
    %19 = math.exp %18 : vector<4x8x16xf32>
    %cst_15 = arith.constant dense<0.000000e+00> : vector<4x8xf32>
    %20 = vector.multi_reduction <add>, %19, %cst_15 [2] : vector<4x8x16xf32> to vector<4x8xf32>
    %21 = vector.shape_cast %20 : vector<4x8xf32> to vector<4x8x1xf32>
    %22 = tpu.reciprocal %21 {approx = true} : vector<4x8x1xf32> -> vector<4x8x1xf32>
    %23 = vector.broadcast %22 : vector<4x8x1xf32> to vector<4x8x16xf32>
    %24 = arith.mulf %19, %23 : vector<4x8x16xf32>
    "tpu.trace_start"() <{level = 10 : i32, message = "hts,hsd->htd"}> : () -> ()
    %cst_16 = arith.constant dense<0.000000e+00> : vector<4x8x8xf32>
    %25 = tpu.matmul %24, %13, %cst_16 {dimension_numbers = #tpu.dot_dimension_numbers<[2], [1], [1], [2], [0, 0, 0, 1, 1, 2], [0], [0]>} : vector<4x8x16xf32>, vector<4x16x8xf32>, vector<4x8x8xf32> -> vector<4x8x8xf32>
    "tpu.trace_stop"() : () -> ()
    %26 = tpu.transpose %25, [1, 0, 2] : vector<4x8x8xf32> -> vector<8x4x8xf32>
    %27 = vector.shape_cast %26 : vector<8x4x8xf32> to vector<8x32xf32>
    %c0_17 = arith.constant 0 : index
    %c0_18 = arith.constant 0 : index
    %28 = vector.load %arg10[%c0_17, %c0_18] : memref<32x32xf32, #tpu.memory_space<vmem>>, vector<32x32xf32>
    %cst_19 = arith.constant dense<0.000000e+00> : vector<8x32xf32>
    %29 = tpu.matmul %27, %28, %cst_19 {dimension_numbers = #tpu.dot_dimension_numbers<[1], [0], [0], [1], [0, 0, 1, 1], [], []>} : vector<8x32xf32>, vector<32x32xf32>, vector<8x32xf32> -> vector<8x32xf32>
    %c0_20 = arith.constant 0 : index
    %c0_21 = arith.constant 0 : index
    %30 = vector.load %arg11[%c0_20, %c0_21] : memref<1x32xf32, #tpu.memory_space<vmem>>, vector<1x32xf32>
    %31 = vector.broadcast %30 : vector<1x32xf32> to vector<8x32xf32>
    %32 = arith.addf %29, %31 : vector<8x32xf32>
    %c0_22 = arith.constant 0 : index
    %c0_23 = arith.constant 0 : index
    %c0_24 = arith.constant 0 : index
    %33 = vector.load %arg12[%c0_22, %c0_23, %c0_24] : memref<1x8x32xf32, #tpu.memory_space<vmem>>, vector<1x8x32xf32>
    %34 = vector.shape_cast %33 : vector<1x8x32xf32> to vector<8x32xf32>
    %35 = vector.shape_cast %32 : vector<8x32xf32> to vector<1x8x32xf32>
    tpu.vector_store %arg12[%c0_22, %c0_23, %c0_24], %35 {strides = array<i32>} : memref<1x8x32xf32, #tpu.memory_space<vmem>>, vector<1x8x32xf32>,
    return
  }
  func.func @transform_0(%arg0: i32, %arg1: i32) -> (i32, i32, i32) {
    %c0_i32 = arith.constant 0 : i32
    %c0_i32_0 = arith.constant 0 : i32
    return %arg0, %arg1, %c0_i32 : i32, i32, i32
  }
  func.func @transform_1(%arg0: i32, %arg1: i32) -> (i32, i32, i32) {
    %c0_i32 = arith.constant 0 : i32
    %c0_i32_0 = arith.constant 0 : i32
    %c0_i32_1 = arith.constant 0 : i32
    return %arg0, %c0_i32, %c0_i32_0 : i32, i32, i32
  }
  func.func @transform_2(%arg0: i32, %arg1: i32) -> (i32, i32) {
    %c0_i32 = arith.constant 0 : i32
    %c0_i32_0 = arith.constant 0 : i32
    %c0_i32_1 = arith.constant 0 : i32
    return %c0_i32, %c0_i32_0 : i32, i32
  }
  func.func @transform_3(%arg0: i32, %arg1: i32) -> (i32, i32) {
    %c0_i32 = arith.constant 0 : i32
    %c0_i32_0 = arith.constant 0 : i32
    %c0_i32_1 = arith.constant 0 : i32
    return %c0_i32, %c0_i32_0 : i32, i32
  }
  func.func @transform_4(%arg0: i32, %arg1: i32) -> (i32, i32) {
    %c0_i32 = arith.constant 0 : i32
    %c0_i32_0 = arith.constant 0 : i32
    %c0_i32_1 = arith.constant 0 : i32
    return %c0_i32, %c0_i32_0 : i32, i32
  }
  func.func @transform_5(%arg0: i32, %arg1: i32) -> (i32, i32) {
    %c0_i32 = arith.constant 0 : i32
    %c0_i32_0 = arith.constant 0 : i32
    %c0_i32_1 = arith.constant 0 : i32
    return %c0_i32, %c0_i32_0 : i32, i32
  }
  func.func @transform_6(%arg0: i32, %arg1: i32) -> (i32, i32) {
    %c0_i32 = arith.constant 0 : i32
    %c0_i32_0 = arith.constant 0 : i32
    %c0_i32_1 = arith.constant 0 : i32
    return %c0_i32, %c0_i32_0 : i32, i32
  }
  func.func @transform_7(%arg0: i32, %arg1: i32) -> (i32, i32) {
    %c0_i32 = arith.constant 0 : i32
    %c0_i32_0 = arith.constant 0 : i32
    %c0_i32_1 = arith.constant 0 : i32
    return %c0_i32, %c0_i32_0 : i32, i32
  }
  func.func @transform_8(%arg0: i32, %arg1: i32) -> (i32, i32) {
    %c0_i32 = arith.constant 0 : i32
    %c0_i32_0 = arith.constant 0 : i32
    %c0_i32_1 = arith.constant 0 : i32
    return %c0_i32, %c0_i32_0 : i32, i32
  }
  func.func @transform_9(%arg0: i32, %arg1: i32) -> (i32, i32) {
    %c0_i32 = arith.constant 0 : i32
    %c0_i32_0 = arith.constant 0 : i32
    %c0_i32_1 = arith.constant 0 : i32
    return %c0_i32, %c0_i32_0 : i32, i32
  }
  func.func @transform_10(%arg0: i32, %arg1: i32) -> (i32, i32, i32) {
    %c0_i32 = arith.constant 0 : i32
    %c0_i32_0 = arith.constant 0 : i32
    return %arg0, %arg1, %c0_i32 : i32, i32, i32
  }
}

</mosaic_0001>

<llo_original>
// kernel: tpu_custom_call.1
$region0: #{tpu_custom_call.1}
  #allocation0 [shape = 'u32[]', space=smem, size = 0x4, offset = 0x4, fixed_abs, tag = 'smem constant byte address 0x4 - core index']
  #allocation1 [shape = 'u32[144,128]{1,0:T(1,128)}', space=vmem, size = 0x12000, scoped, tag = 'internal scratch']
  #allocation2 [shape = 'f32[4,16,8]{2,1,0:T(8,128)}', space=vmem, size = 0x8000, scoped, tag = 'scratch operand']
  #allocation3 [shape = 'f32[4,16,8]{2,1,0:T(8,128)}', space=vmem, size = 0x8000, scoped, tag = 'scratch operand']
  %s0 = inlined_call_operand.hbm [shape: f32[2,8,32], index: 0, kind: input, shape index: {}]
  %s1 = inlined_call_operand.hbm [shape: f32[2,16,32], index: 1, kind: input, shape index: {}]
  %s2 = inlined_call_operand.hbm [shape: f32[32,32], index: 2, kind: input, shape index: {}]
  %s3 = inlined_call_operand.vmem [shape: f32[1,32], index: 3, kind: input, shape index: {}]
  %s4 = inlined_call_operand.hbm [shape: f32[32,32], index: 4, kind: input, shape index: {}]
  %s5 = inlined_call_operand.vmem [shape: f32[1,32], index: 5, kind: input, shape index: {}]
  %s6 = inlined_call_operand.hbm [shape: f32[32,32], index: 6, kind: input, shape index: {}]
  %s7 = inlined_call_operand.vmem [shape: f32[1,32], index: 7, kind: input, shape index: {}]
  %s8 = inlined_call_operand.hbm [shape: f32[32,32], index: 8, kind: input, shape index: {}]
  %s9 = inlined_call_operand.vmem [shape: f32[1,32], index: 9, kind: input, shape index: {}]
  %s10 = inlined_call_operand.hbm [shape: f32[2,8,32], index: 10, kind: output, shape index: {}]
  %s11 = sld [smem:[#allocation0]]
  $region101: #{tpu_custom_call.1} parent=0
    _
  %s13 = ssub.s32 1, %s11
  %s14 = scalar_select 0, %s13, %s11
  $region1: #{tpu_custom_call.1} parent=0
    #allocation4 [shape = 'u8[8192]{0}', space=vmem, size = 0x2000, scoped, tag = 'input window, operand 0']
    #allocation5 [shape = 's32[2]{0}', space=sflag, size = 0x8, scoped, tag = 'scoped memory for tpu_custom_call.1']
    #allocation6 [shape = 's32[2]{0}', space=sflag, size = 0x8, scoped, tag = 'scoped memory for tpu_custom_call.1']
    #allocation7 [shape = 'u8[16384]{0}', space=vmem, size = 0x4000, scoped, tag = 'input window, operand 1']
    #allocation8 [shape = 's32[2]{0}', space=sflag, size = 0x8, scoped, tag = 'scoped memory for tpu_custom_call.1']
    #allocation9 [shape = 'u8[16384]{0}', space=vmem, size = 0x4000, scoped, tag = 'input window, operand 2, single buffered']
    #allocation10 [shape = 'u8[16384]{0}', space=vmem, size = 0x4000, scoped, tag = 'input window, operand 4, single buffered']
    #allocation11 [shape = 's32[1]{0}', space=sflag, size = 0x4, scoped, tag = 'scoped memory for tpu_custom_call.1']
    #allocation12 [shape = 'u8[16384]{0}', space=vmem, size = 0x4000, scoped, tag = 'input window, operand 6, single buffered']
    #allocation13 [shape = 'u8[16384]{0}', space=vmem, size = 0x4000, scoped, tag = 'input window, operand 8, single buffered']
    #allocation14 [shape = 's32[1]{0}', space=sflag, size = 0x4, scoped, tag = 'scoped memory for tpu_custom_call.1']
    #allocation15 [shape = 'u8[8192]{0}', space=vmem, size = 0x2000, scoped, tag = 'output window, operand 0']
    %15 = vsyncpa [#allocation5], 0
    %s16 = scalar_lea.sflag [#allocation5], 1
    %17 = vsyncpa %s16, 0
    %18 = vsyncpa [#allocation8], 0
    %s19 = scalar_lea.sflag [#allocation8], 1
    %20 = vsyncpa %s19, 0
    %21 = vsyncpa [#allocation11], 0
    %22 = vsyncpa [#allocation14], 0
    %23 = vsyncpa [#allocation6], 0
    %s24 = scalar_lea.sflag [#allocation6], 1
    %25 = vsyncpa %s24, 0
    loop: start=0, step=1, limit=4
    $region2: #{tpu_custom_call.1} parent=1 // loop_pre_header
      _
    $region3: #{tpu_custom_call.1} parent=1 // loop_header
      %s27 = sphi 0, %s31
      %p28 = scmp.ge.s32.totalorder %s27, 4
      %s34 = sphi 0, %s46
      %s35 = sphi 0, %s42
      %s36 = sphi 0, %s34
      %s37 = sphi 0, %s35
      %s38 = sphi 0, %s36
      %s39 = sphi 0, %s37
      %s51 = sphi 0, %s53
      %s54 = sphi 0, %s51
      %s55 = sphi 0, %s54
      %s71 = sphi 0, %s55
      %s77 = sphi 0, %s79
      %s80 = sphi 0, %s77
      %s81 = sphi 0, %s80
      %s97 = sphi 0, %s81
      %s101 = sphi 0, %s101
      %s103 = sphi 0, %s101
      %s104 = sphi 0, %s103
      %s118 = sphi 0, %s104
      %s122 = sphi 0, %s122
      %s124 = sphi 0, %s122
      %s125 = sphi 0, %s124
      %s139 = sphi 0, %s125
      %s143 = sphi 0, %s143
      %s145 = sphi 0, %s143
      %s146 = sphi 0, %s145
      %s160 = sphi 0, %s146
      %s164 = sphi 0, %s164
      %s166 = sphi 0, %s164
      %s167 = sphi 0, %s166
      %s181 = sphi 0, %s167
      %s185 = sphi 0, %s185
      %s187 = sphi 0, %s185
      %s188 = sphi 0, %s187
      %s202 = sphi 0, %s188
      %s206 = sphi 0, %s206
      %s208 = sphi 0, %s206
      %s209 = sphi 0, %s208
      %s223 = sphi 0, %s209
      %s227 = sphi 0, %s227
      %s229 = sphi 0, %s227
      %s230 = sphi 0, %s229
      %s244 = sphi 0, %s230
      %s248 = sphi 0, %s248
      %s250 = sphi 0, %s248
      %s251 = sphi 0, %s250
      %s265 = sphi 0, %s251
      %s273 = sphi 0, %s275
      %s276 = sphi 0, %s273
      %s277 = sphi 0, %s276
      %s293 = sphi 0, %s277
    $region4: #{tpu_custom_call.1} parent=1 // loop_header_branch
      %30 = sbr.rel (%p28) target = $region8
    $region5: #{tpu_custom_call.1} parent=1 // loop_body
      %s32 = ssub.s32 %s27, 1
      %s33 = ssub.s32 %s27, 2
      %s40 = sadd.s32 1, %s35
      %p41 = scmp.ge.s32.totalorder %s40, 1
      %s42 = scalar_select %p41, 0, %s40
      %s43 = sadd.s32 1, %s34
      %s44 = scalar_select %p41, %s43, %s34
      %p45 = scmp.ge.s32.totalorder %s44, 2
      %s46 = scalar_select %p45, 0, %s44
      %s47 = ssub.s32 %s34, %s46
      %s48 = ssub.s32 %s35, %s42
      %s49 = sor.u32 %s47, %s48
      %p50 = scmp.eq.s32.totalorder %s49, 0
      %s52 = sadd.s32 %s51, 1
      %s53 = scalar_select %p50, %s51, %s52
      %p56 = pneg %p50
      %p57 = scmp.eq.s32.totalorder %s27, 1
      %p58 = por %p56, %p57
      %p59 = scmp.ne.s32.totalorder %s51, %s54
      %p60 = scmp.eq.s32.totalorder %s27, 0
      %p61 = por %p59, %p60
      %p62 = scmp.ne.s32.totalorder %s51, %s54
      %p63 = scmp.eq.s32.totalorder %s32, 1
      %p64 = por %p62, %p63
      %p65 = scmp.ne.s32.totalorder %s54, %s55
      %p66 = scmp.eq.s32.totalorder %s32, 0
      %p67 = por %p65, %p66
      %p68 = scmp.ne.s32.totalorder %s54, %s55
      %p69 = scmp.eq.s32.totalorder %s33, 1
      %p70 = por %p68, %p69
      %p72 = scmp.ne.s32.totalorder %s55, %s71
      %p73 = scmp.eq.s32.totalorder %s33, 0
      %p74 = por %p72, %p73
      %s75 = ssub.s32 %s34, %s46
      %p76 = scmp.eq.s32.totalorder %s75, 0
      %s78 = sadd.s32 %s77, 1
      %s79 = scalar_select %p76, %s77, %s78
      %p82 = pneg %p76
      %p83 = scmp.eq.s32.totalorder %s27, 1
      %p84 = por %p82, %p83
      %p85 = scmp.ne.s32.totalorder %s77, %s80
      %p86 = scmp.eq.s32.totalorder %s27, 0
      %p87 = por %p85, %p86
      %p88 = scmp.ne.s32.totalorder %s77, %s80
      %p89 = scmp.eq.s32.totalorder %s32, 1
      %p90 = por %p88, %p89
      %p91 = scmp.ne.s32.totalorder %s80, %s81
      %p92 = scmp.eq.s32.totalorder %s32, 0
      %p93 = por %p91, %p92
      %p94 = scmp.ne.s32.totalorder %s80, %s81
      %p95 = scmp.eq.s32.totalorder %s33, 1
      %p96 = por %p94, %p95
      %p98 = scmp.ne.s32.totalorder %s81, %s97
      %p99 = scmp.eq.s32.totalorder %s33, 0
      %p100 = por %p98, %p99
      %s102 = sadd.s32 %s101, 1
      %p105 = scmp.eq.s32.totalorder %s27, 1
      %p106 = scmp.ne.s32.totalorder %s101, %s103
      %p107 = scmp.eq.s32.totalorder %s27, 0
      %p108 = por %p106, %p107
      %p109 = scmp.ne.s32.totalorder %s101, %s103
      %p110 = scmp.eq.s32.totalorder %s32, 1
      %p111 = por %p109, %p110
      %p112 = scmp.ne.s32.totalorder %s103, %s104
      %p113 = scmp.eq.s32.totalorder %s32, 0
      %p114 = por %p112, %p113
      %p115 = scmp.ne.s32.totalorder %s103, %s104
      %p116 = scmp.eq.s32.totalorder %s33, 1
      %p117 = por %p115, %p116
      %p119 = scmp.ne.s32.totalorder %s104, %s118
      %p120 = scmp.eq.s32.totalorder %s33, 0
      %p121 = por %p119, %p120
      %s123 = sadd.s32 %s122, 1
      %p126 = scmp.eq.s32.totalorder %s27, 1
      %p127 = scmp.ne.s32.totalorder %s122, %s124
      %p128 = scmp.eq.s32.totalorder %s27, 0
      %p129 = por %p127, %p128
      %p130 = scmp.ne.s32.totalorder %s122, %s124
      %p131 = scmp.eq.s32.totalorder %s32, 1
      %p132 = por %p130, %p131
      %p133 = scmp.ne.s32.totalorder %s124, %s125
      %p134 = scmp.eq.s32.totalorder %s32, 0
      %p135 = por %p133, %p134
      %p136 = scmp.ne.s32.totalorder %s124, %s125
      %p137 = scmp.eq.s32.totalorder %s33, 1
      %p138 = por %p136, %p137
      %p140 = scmp.ne.s32.totalorder %s125, %s139
      %p141 = scmp.eq.s32.totalorder %s33, 0
      %p142 = por %p140, %p141
      %s144 = sadd.s32 %s143, 1
      %p147 = scmp.eq.s32.totalorder %s27, 1
      %p148 = scmp.ne.s32.totalorder %s143, %s145
      %p149 = scmp.eq.s32.totalorder %s27, 0
      %p150 = por %p148, %p149
      %p151 = scmp.ne.s32.totalorder %s143, %s145
      %p152 = scmp.eq.s32.totalorder %s32, 1
      %p153 = por %p151, %p152
      %p154 = scmp.ne.s32.totalorder %s145, %s146
      %p155 = scmp.eq.s32.totalorder %s32, 0
      %p156 = por %p154, %p155
      %p157 = scmp.ne.s32.totalorder %s145, %s146
      %p158 = scmp.eq.s32.totalorder %s33, 1
      %p159 = por %p157, %p158
      %p161 = scmp.ne.s32.totalorder %s146, %s160
      %p162 = scmp.eq.s32.totalorder %s33, 0
      %p163 = por %p161, %p162
      %s165 = sadd.s32 %s164, 1
      %p168 = scmp.eq.s32.totalorder %s27, 1
      %p169 = scmp.ne.s32.totalorder %s164, %s166
      %p170 = scmp.eq.s32.totalorder %s27, 0
      %p171 = por %p169, %p170
      %p172 = scmp.ne.s32.totalorder %s164, %s166
      %p173 = scmp.eq.s32.totalorder %s32, 1
      %p174 = por %p172, %p173
      %p175 = scmp.ne.s32.totalorder %s166, %s167
      %p176 = scmp.eq.s32.totalorder %s32, 0
      %p177 = por %p175, %p176
      %p178 = scmp.ne.s32.totalorder %s166, %s167
      %p179 = scmp.eq.s32.totalorder %s33, 1
      %p180 = por %p178, %p179
      %p182 = scmp.ne.s32.totalorder %s167, %s181
      %p183 = scmp.eq.s32.totalorder %s33, 0
      %p184 = por %p182, %p183
      %s186 = sadd.s32 %s185, 1
      %p189 = scmp.eq.s32.totalorder %s27, 1
      %p190 = scmp.ne.s32.totalorder %s185, %s187
      %p191 = scmp.eq.s32.totalorder %s27, 0
      %p192 = por %p190, %p191
      %p193 = scmp.ne.s32.totalorder %s185, %s187
      %p194 = scmp.eq.s32.totalorder %s32, 1
      %p195 = por %p193, %p194
      %p196 = scmp.ne.s32.totalorder %s187, %s188
      %p197 = scmp.eq.s32.totalorder %s32, 0
      %p198 = por %p196, %p197
      %p199 = scmp.ne.s32.totalorder %s187, %s188
      %p200 = scmp.eq.s32.totalorder %s33, 1
      %p201 = por %p199, %p200
      %p203 = scmp.ne.s32.totalorder %s188, %s202
      %p204 = scmp.eq.s32.totalorder %s33, 0
      %p205 = por %p203, %p204
      %s207 = sadd.s32 %s206, 1
      %p210 = scmp.eq.s32.totalorder %s27, 1
      %p211 = scmp.ne.s32.totalorder %s206, %s208
      %p212 = scmp.eq.s32.totalorder %s27, 0
      %p213 = por %p211, %p212
      %p214 = scmp.ne.s32.totalorder %s206, %s208
      %p215 = scmp.eq.s32.totalorder %s32, 1
      %p216 = por %p214, %p215
      %p217 = scmp.ne.s32.totalorder %s208, %s209
      %p218 = scmp.eq.s32.totalorder %s32, 0
      %p219 = por %p217, %p218
      %p220 = scmp.ne.s32.totalorder %s208, %s209
      %p221 = scmp.eq.s32.totalorder %s33, 1
      %p222 = por %p220, %p221
      %p224 = scmp.ne.s32.totalorder %s209, %s223
      %p225 = scmp.eq.s32.totalorder %s33, 0
      %p226 = por %p224, %p225
      %s228 = sadd.s32 %s227, 1
      %p231 = scmp.eq.s32.totalorder %s27, 1
      %p232 = scmp.ne.s32.totalorder %s227, %s229
      %p233 = scmp.eq.s32.totalorder %s27, 0
      %p234 = por %p232, %p233
      %p235 = scmp.ne.s32.totalorder %s227, %s229
      %p236 = scmp.eq.s32.totalorder %s32, 1
      %p237 = por %p235, %p236
      %p238 = scmp.ne.s32.totalorder %s229, %s230
      %p239 = scmp.eq.s32.totalorder %s32, 0
      %p240 = por %p238, %p239
      %p241 = scmp.ne.s32.totalorder %s229, %s230
      %p242 = scmp.eq.s32.totalorder %s33, 1
      %p243 = por %p241, %p242
      %p245 = scmp.ne.s32.totalorder %s230, %s244
      %p246 = scmp.eq.s32.totalorder %s33, 0
      %p247 = por %p245, %p246
      %s249 = sadd.s32 %s248, 1
      %p252 = scmp.eq.s32.totalorder %s27, 1
      %p253 = scmp.ne.s32.totalorder %s248, %s250
      %p254 = scmp.eq.s32.totalorder %s27, 0
      %p255 = por %p253, %p254
      %p256 = scmp.ne.s32.totalorder %s248, %s250
      %p257 = scmp.eq.s32.totalorder %s32, 1
      %p258 = por %p256, %p257
      %p259 = scmp.ne.s32.totalorder %s250, %s251
      %p260 = scmp.eq.s32.totalorder %s32, 0
      %p261 = por %p259, %p260
      %p262 = scmp.ne.s32.totalorder %s250, %s251
      %p263 = scmp.eq.s32.totalorder %s33, 1
      %p264 = por %p262, %p263
      %p266 = scmp.ne.s32.totalorder %s251, %s265
      %p267 = scmp.eq.s32.totalorder %s33, 0
      %p268 = por %p266, %p267
      %s269 = ssub.s32 %s34, %s46
      %s270 = ssub.s32 %s35, %s42
      %s271 = sor.u32 %s269, %s270
      %p272 = scmp.eq.s32.totalorder %s271, 0
      %s274 = sadd.s32 %s273, 1
      %s275 = scalar_select %p272, %s273, %s274
      %p278 = pneg %p272
      %p279 = scmp.eq.s32.totalorder %s27, 1
      %p280 = por %p278, %p279
      %p281 = scmp.ne.s32.totalorder %s273, %s276
      %p282 = scmp.eq.s32.totalorder %s27, 0
      %p283 = por %p281, %p282
      %p284 = scmp.ne.s32.totalorder %s273, %s276
      %p285 = scmp.eq.s32.totalorder %s32, 1
      %p286 = por %p284, %p285
      %p287 = scmp.ne.s32.totalorder %s276, %s277
      %p288 = scmp.eq.s32.totalorder %s32, 0
      %p289 = por %p287, %p288
      %p290 = scmp.ne.s32.totalorder %s276, %s277
      %p291 = scmp.eq.s32.totalorder %s33, 1
      %p292 = por %p290, %p291
      %p294 = scmp.ne.s32.totalorder %s277, %s293
      %p295 = scmp.eq.s32.totalorder %s33, 0
      %p296 = por %p294, %p295
      %p297 = scmp.le.s32.totalorder 1, %s27
      %p298 = scmp.lt.s32.totalorder %s27, 3
      %p299 = pnand %p297, %p298
      %p300 = pneg %p299
      // Predicated region
      $region9: #{tpu_custom_call.1} parent=5 // pred_check
        _
      $region10: #{tpu_custom_call.1} parent=5 // pred_check_branch
        %302 = sbr.rel (%p299) target = $region12
      $region11: #{tpu_custom_call.1} parent=5 // pred_region
        %s303 = ssub.s32 %s27, 1
        // Predicated region
        $region13: #{tpu_custom_call.1} parent=11 // pred_check
          %p304 = pneg %p114
        $region14: #{tpu_custom_call.1} parent=11 // pred_check_branch
          %306 = sbr.rel (%p304) target = $region16
        $region15: #{tpu_custom_call.1} parent=11 // pred_region
          %s308 = ssub.s32 512, 512
          %309 = vsyncadd [#allocation8], %s308
          %s310 = sshll.u32 [#allocation9], 4
          %s311 = int_to_ptr.vmem [resolvable:$true] %s310
          %316 = dma.hbm_to_vmem [thread:$0]  %s2, 512, %s311, [#allocation8], 128, 128, 8
        $region16: #{tpu_custom_call.1} parent=11 // pred_fallthru
          _
        // Predicated region
        $region17: #{tpu_custom_call.1} parent=11 // pred_check
          %p317 = pneg %p135
        $region18: #{tpu_custom_call.1} parent=11 // pred_check_branch
          %319 = sbr.rel (%p317) target = $region20
        $region19: #{tpu_custom_call.1} parent=11 // pred_region
          _
        $region20: #{tpu_custom_call.1} parent=11 // pred_fallthru
          _
        // Predicated region
        $region21: #{tpu_custom_call.1} parent=11 // pred_check
          %p320 = pneg %p156
        $region22: #{tpu_custom_call.1} parent=11 // pred_check_branch
          %322 = sbr.rel (%p320) target = $region24
        $region23: #{tpu_custom_call.1} parent=11 // pred_region
          %s324 = ssub.s32 512, 512
          %325 = vsyncadd [#allocation11], %s324
          %s326 = sshll.u32 [#allocation10], 4
          %s327 = int_to_ptr.vmem [resolvable:$true] %s326
          %332 = dma.hbm_to_vmem [thread:$0]  %s4, 512, %s327, [#allocation11], 128, 128, 8
        $region24: #{tpu_custom_call.1} parent=11 // pred_fallthru
          _
        // Predicated region
        $region25: #{tpu_custom_call.1} parent=11 // pred_check
          %p333 = pneg %p177
        $region26: #{tpu_custom_call.1} parent=11 // pred_check_branch
          %335 = sbr.rel (%p333) target = $region28
        $region27: #{tpu_custom_call.1} parent=11 // pred_region
          _
        $region28: #{tpu_custom_call.1} parent=11 // pred_fallthru
          _
        // Predicated region
        $region29: #{tpu_custom_call.1} parent=11 // pred_check
          %p336 = pneg %p198
        $region30: #{tpu_custom_call.1} parent=11 // pred_check_branch
          %338 = sbr.rel (%p336) target = $region32
        $region31: #{tpu_custom_call.1} parent=11 // pred_region
          %s340 = ssub.s32 512, 512
          %341 = vsyncadd [#allocation11], %s340
          %s342 = sshll.u32 [#allocation12], 4
          %s343 = int_to_ptr.vmem [resolvable:$true] %s342
          %348 = dma.hbm_to_vmem [thread:$0]  %s6, 512, %s343, [#allocation11], 128, 128, 8
        $region32: #{tpu_custom_call.1} parent=11 // pred_fallthru
          _
        // Predicated region
        $region33: #{tpu_custom_call.1} parent=11 // pred_check
          %p349 = pneg %p219
        $region34: #{tpu_custom_call.1} parent=11 // pred_check_branch
          %351 = sbr.rel (%p349) target = $region36
        $region35: #{tpu_custom_call.1} parent=11 // pred_region
          _
        $region36: #{tpu_custom_call.1} parent=11 // pred_fallthru
          _
        // Predicated region
        $region37: #{tpu_custom_call.1} parent=11 // pred_check
          %p352 = pneg %p240
        $region38: #{tpu_custom_call.1} parent=11 // pred_check_branch
          %354 = sbr.rel (%p352) target = $region40
        $region39: #{tpu_custom_call.1} parent=11 // pred_region
          %s356 = ssub.s32 512, 512
          %357 = vsyncadd [#allocation14], %s356
          %s358 = sshll.u32 [#allocation13], 4
          %s359 = int_to_ptr.vmem [resolvable:$true] %s358
          %364 = dma.hbm_to_vmem [thread:$0]  %s8, 512, %s359, [#allocation14], 128, 128, 8
        $region40: #{tpu_custom_call.1} parent=11 // pred_fallthru
          _
        // Predicated region
        $region41: #{tpu_custom_call.1} parent=11 // pred_check
          %p365 = pneg %p261
        $region42: #{tpu_custom_call.1} parent=11 // pred_check_branch
          %367 = sbr.rel (%p365) target = $region44
        $region43: #{tpu_custom_call.1} parent=11 // pred_region
          _
        $region44: #{tpu_custom_call.1} parent=11 // pred_fallthru
          _
      $region12: #{tpu_custom_call.1} parent=5 // pred_fallthru
        _
      %p368 = scmp.lt.s32.totalorder %s27, 2
      // Predicated region
      $region45: #{tpu_custom_call.1} parent=5 // pred_check
        %p369 = pneg %p368
      $region46: #{tpu_custom_call.1} parent=5 // pred_check_branch
        %371 = sbr.rel (%p369) target = $region48
      $region47: #{tpu_custom_call.1} parent=5 // pred_region
        // Predicated region
        $region49: #{tpu_custom_call.1} parent=47 // pred_check
          %p372 = pneg %p61
        $region50: #{tpu_custom_call.1} parent=47 // pred_check_branch
          %374 = sbr.rel (%p372) target = $region52
        $region51: #{tpu_custom_call.1} parent=47 // pred_region
          %s375 = sand.u32 %s51, 1
          %s376 = scalar_lea.sflag [#allocation5], %s375
          %s377 = sand.u32 %s51, 1
          %s378 = smul.addr %s377, 8
          %s379 = scalar_lea.vmem [#allocation4], %s378
          %s381 = ssub.s32 128, 128
          %382 = vsyncadd %s376, %s381
          %s383 = sadd.s32 %s35, %s34
          %s384 = smul.addr %s383, 128
          %s385 = scalar_lea.hbm %s0, %s384
          %s387 = sshll.u32 %s379, 4
          %s388 = int_to_ptr.vmem [resolvable:$true] %s387
          %390 = dma.hbm_to_vmem [thread:$0]  %s385, 128, %s388, %s376
        $region52: #{tpu_custom_call.1} parent=47 // pred_fallthru
          _
        // Predicated region
        $region53: #{tpu_custom_call.1} parent=47 // pred_check
          %p391 = pneg %p87
        $region54: #{tpu_custom_call.1} parent=47 // pred_check_branch
          %393 = sbr.rel (%p391) target = $region56
        $region55: #{tpu_custom_call.1} parent=47 // pred_region
          %s394 = sand.u32 %s27, 1
          %s395 = scalar_lea.sflag [#allocation8], %s394
          %s396 = sand.u32 %s77, 1
          %s397 = smul.addr %s396, 16
          %s398 = scalar_lea.vmem [#allocation7], %s397
          %s400 = ssub.s32 256, 256
          %401 = vsyncadd %s395, %s400
          %s402 = smul.addr %s34, 2
          %s403 = smul.addr %s402, 128
          %s404 = scalar_lea.hbm %s1, %s403
          %s405 = sshll.u32 %s398, 4
          %s406 = int_to_ptr.vmem [resolvable:$true] %s405
          %411 = dma.hbm_to_vmem [thread:$0]  %s404, 256, %s406, %s395, 128, 128, 8
        $region56: #{tpu_custom_call.1} parent=47 // pred_fallthru
          _
      $region48: #{tpu_custom_call.1} parent=5 // pred_fallthru
        _
      %p412 = scmp.le.s32.totalorder 1, %s27
      %p413 = scmp.lt.s32.totalorder %s27, 3
      %p414 = pnand %p412, %p413
      %p415 = pneg %p414
      // Predicated region
      $region57: #{tpu_custom_call.1} parent=5 // pred_check
        _
      $region58: #{tpu_custom_call.1} parent=5 // pred_check_branch
        %417 = sbr.rel (%p414) target = $region60
      $region59: #{tpu_custom_call.1} parent=5 // pred_region
        %s418 = ssub.s32 %s27, 1
        %s419 = sand.u32 %s54, 1
        %s420 = scalar_lea.sflag [#allocation5], %s419
        %s421 = sand.u32 %s54, 1
        %s422 = smul.addr %s421, 8
        %s423 = scalar_lea.vmem [#allocation4], %s422
        // Predicated region
        $region61: #{tpu_custom_call.1} parent=59 // pred_check
          %p424 = pneg %p67
        $region62: #{tpu_custom_call.1} parent=59 // pred_check_branch
          %426 = sbr.rel (%p424) target = $region64
        $region63: #{tpu_custom_call.1} parent=59 // pred_region
          %427 = dma.done %s420, 128
        $region64: #{tpu_custom_call.1} parent=59 // pred_fallthru
          _
        %s428 = sand.u32 %s32, 1
        %s429 = scalar_lea.sflag [#allocation8], %s428
        %s430 = sand.u32 %s80, 1
        %s431 = smul.addr %s430, 16
        %s432 = scalar_lea.vmem [#allocation7], %s431
        // Predicated region
        $region65: #{tpu_custom_call.1} parent=59 // pred_check
          %p433 = pneg %p93
        $region66: #{tpu_custom_call.1} parent=59 // pred_check_branch
          %435 = sbr.rel (%p433) target = $region68
        $region67: #{tpu_custom_call.1} parent=59 // pred_region
          %436 = dma.done %s429, 256
        $region68: #{tpu_custom_call.1} parent=59 // pred_fallthru
          _
        // Predicated region
        $region69: #{tpu_custom_call.1} parent=59 // pred_check
          %p437 = pneg %p114
        $region70: #{tpu_custom_call.1} parent=59 // pred_check_branch
          %439 = sbr.rel (%p437) target = $region72
        $region71: #{tpu_custom_call.1} parent=59 // pred_region
          %440 = dma.done [#allocation8], 512
        $region72: #{tpu_custom_call.1} parent=59 // pred_fallthru
          _
        // Predicated region
        $region73: #{tpu_custom_call.1} parent=59 // pred_check
          %p441 = pneg %p156
        $region74: #{tpu_custom_call.1} parent=59 // pred_check_branch
          %443 = sbr.rel (%p441) target = $region76
        $region75: #{tpu_custom_call.1} parent=59 // pred_region
          %444 = dma.done [#allocation11], 512
        $region76: #{tpu_custom_call.1} parent=59 // pred_fallthru
          _
        // Predicated region
        $region77: #{tpu_custom_call.1} parent=59 // pred_check
          %p445 = pneg %p198
        $region78: #{tpu_custom_call.1} parent=59 // pred_check_branch
          %447 = sbr.rel (%p445) target = $region80
        $region79: #{tpu_custom_call.1} parent=59 // pred_region
          %448 = dma.done [#allocation11], 512
        $region80: #{tpu_custom_call.1} parent=59 // pred_fallthru
          _
        // Predicated region
        $region81: #{tpu_custom_call.1} parent=59 // pred_check
          %p449 = pneg %p240
        $region82: #{tpu_custom_call.1} parent=59 // pred_check_branch
          %451 = sbr.rel (%p449) target = $region84
        $region83: #{tpu_custom_call.1} parent=59 // pred_region
          %452 = dma.done [#allocation14], 512
        $region84: #{tpu_custom_call.1} parent=59 // pred_fallthru
          _
        %s453 = sand.u32 %s54, 1
        %s454 = scalar_lea.sflag [#allocation5], %s453
        %s455 = sand.u32 %s54, 1
        %s456 = smul.addr %s455, 8
        %s457 = scalar_lea.vmem [#allocation4], %s456
        %p458 = pneg %p67
        %p459 = pneg %p64
        %s460 = sand.u32 %s32, 1
        %s461 = scalar_lea.sflag [#allocation8], %s460
        %s462 = sand.u32 %s80, 1
        %s463 = smul.addr %s462, 16
        %s464 = scalar_lea.vmem [#allocation7], %s463
        %p465 = pneg %p93
        %p466 = pneg %p90
        %p467 = pneg %p114
        %p468 = pneg %p111
        %p469 = pneg %p135
        %p470 = pneg %p132
        %p471 = pneg %p156
        %p472 = pneg %p153
        %p473 = pneg %p177
        %p474 = pneg %p174
        %p475 = pneg %p198
        %p476 = pneg %p195
        %p477 = pneg %p219
        %p478 = pneg %p216
        %p479 = pneg %p240
        %p480 = pneg %p237
        %p481 = pneg %p261
        %p482 = pneg %p258
        %p483 = pneg %p289
        %p484 = pneg %p286
        %s485 = sand.u32 %s276, 1
        %s486 = scalar_lea.sflag [#allocation6], %s485
        %s487 = sand.u32 %s276, 1
        %s488 = smul.addr %s487, 8
        %s489 = scalar_lea.vmem [#allocation15], %s488
        %p490 = scmp.eq.s32.totalorder %s37, 0
        // Predicated region
        $region85: #{tpu_custom_call.1} parent=59 // pred_check
          %p491 = pneg %p490
        $region86: #{tpu_custom_call.1} parent=59 // pred_check_branch
          %493 = sbr.rel (%p491) target = $region88
        $region87: #{tpu_custom_call.1} parent=59 // pred_region
          %v494 = vld [vmem:[%s432] sm:$0xff]
          %v495 = vld [vmem:[%s432 + $0x8] sm:$0xff]
          %v496 = vld [vmem:[#allocation10] sm:$0xff]
          %v497 = vld [vmem:[#allocation10 + $0x8] sm:$0xff]
          %v498 = vld [vmem:[#allocation10 + $0x10] sm:$0xff]
          %v499 = vld [vmem:[#allocation10 + $0x18] sm:$0xff]
          %v500 = vld [vmem:[%s5] sm:$0x1]
          %v502 = vlaneseq
          %v503 = vshrl.u32 %v502, 7
          %v504 = vsub.s32 0, %v503
          %v505 = vrot.slane %v500, %v504
          %vm507 = vcmask 261120
          %v509 = vsel %vm507, %v494, 0
          %v512 = vsel %vm507, %v495, 0
          %514 = vmatprep.subr.mxu0 0.0
          %515 = vmatpush1.msra.mxu0 %v496
          %516 = vmatprep.subr.mxu0 0.0
          %517 = vmatpush1.msra.mxu0 %v497
          %518 = vmatprep.subr.mxu0 0.0
          %519 = vmatpush1.msra.mxu0 %v498
          %520 = vmatprep.subr.mxu0 0.0
          %521 = vmatpush1.msra.mxu0 %v499
          %522 = vmatprep.subr.mxu0 0.0
          %523 = vmatpush1.msra.mxu0 0.0
          %524 = vmatprep.subr.mxu0 0.0
          %525 = vmatpush1.msra.mxu0 0.0
          %526 = vmatprep.subr.mxu0 0.0
          %527 = vmatpush1.msra.mxu0 0.0
          %528 = vmatprep.subr.mxu0 0.0
          %529 = vmatpush1.msra.mxu0 0.0
          %530 = vmatprep.subr.mxu0 0.0
          %531 = vmatpush1.msra.mxu0 0.0
          %532 = vmatprep.subr.mxu0 0.0
          %533 = vmatpush1.msra.mxu0 0.0
          %534 = vmatprep.subr.mxu0 0.0
          %535 = vmatpush1.msra.mxu0 0.0
          %536 = vmatprep.subr.mxu0 0.0
          %537 = vmatpush1.msra.mxu0 0.0
          %538 = vmatprep.subr.mxu0 0.0
          %539 = vmatpush1.msra.mxu0 0.0
          %540 = vmatprep.subr.mxu0 0.0
          %541 = vmatpush1.msra.mxu0 0.0
          %542 = vmatprep.subr.mxu0 0.0
          %543 = vmatpush1.msra.mxu0 0.0
          %544 = vmatprep.subr.mxu0 0.0
          %545 = vmatpush1.msra.mxu0 0.0
          %546 = vmatprep.subr.mxu0 0.0
          %547 = vmatpush1.msra.mxu0 0.0
          %548 = vmatprep.subr.mxu0 0.0
          %549 = vmatpush1.msra.mxu0 0.0
          %550 = vmatprep.subr.mxu0 0.0
          %551 = vmatpush1.msra.mxu0 0.0
          %552 = vmatprep.subr.mxu0 0.0
          %553 = vmatpush1.msra.mxu0 0.0
          %554 = vmatprep.subr.mxu0 0.0
          %555 = vmatpush1.msra.mxu0 0.0
          %556 = vmatprep.subr.mxu0 0.0
          %557 = vmatpush1.msra.mxu0 0.0
          %558 = vmatprep.subr.mxu0 0.0
          %559 = vmatpush1.msra.mxu0 0.0
          %560 = vmatprep.subr.mxu0 0.0
          %561 = vmatpush1.msra.mxu0 0.0
          %562 = vmatprep.subr.mxu0 0.0
          %563 = vmatpush1.msra.mxu0 0.0
          %564 = vmatprep.subr.mxu0 0.0
          %565 = vmatpush1.msra.mxu0 0.0
          %566 = vmatprep.subr.mxu0 0.0
          %567 = vmatpush1.msra.mxu0 0.0
          %568 = vmatprep.subr.mxu0 0.0
          %569 = vmatpush1.msra.mxu0 0.0
          %570 = vmatprep.subr.mxu0 0.0
          %571 = vmatpush1.msra.mxu0 0.0
          %572 = vmatprep.subr.mxu0 0.0
          %573 = vmatpush1.msra.mxu0 0.0
          %574 = vmatprep.subr.mxu0 0.0
          %575 = vmatpush1.msra.mxu0 0.0
          %576 = vmatprep.subr.mxu0 0.0
          %577 = vmatpush1.msra.mxu0 0.0
          %578 = vmatprep.mubr.f32.mxu0 0.0
          %579 = vmatmul.mubr.f32.gmra.mrb[0].mxu0 %v509
          %v580 = vpop.f32.mrb[0].mxu0
          %v581 = vadd.f32 %v505, %v580
          %v582 = vpop.f32.mrb[0].mxu0
          %583 = vmatprep.mubr.f32.mxu0 0.0
          %584 = vmatmul.mubr.f32.gmra.mrb[0].mxu0 %v512
          %v585 = vpop.f32.mrb[0].mxu0
          %v586 = vadd.f32 %v505, %v585
          %v587 = vpop.f32.mrb[0].mxu0
          %588 = vdwg.mxu0
          %v589 = vld [vmem:[#allocation12] sm:$0xff]
          %v590 = vld [vmem:[#allocation12 + $0x8] sm:$0xff]
          %v591 = vld [vmem:[#allocation12 + $0x10] sm:$0xff]
          %v592 = vld [vmem:[#allocation12 + $0x18] sm:$0xff]
          %v593 = vld [vmem:[%s7] sm:$0x1]
          %v595 = vlaneseq
          %v596 = vshrl.u32 %v595, 7
          %v597 = vsub.s32 0, %v596
          %v598 = vrot.slane %v593, %v597
          %600 = vmatprep.subr.mxu0 0.0
          %601 = vmatpush1.msra.mxu0 %v589
          %602 = vmatprep.subr.mxu0 0.0
          %603 = vmatpush1.msra.mxu0 %v590
          %604 = vmatprep.subr.mxu0 0.0
          %605 = vmatpush1.msra.mxu0 %v591
          %606 = vmatprep.subr.mxu0 0.0
          %607 = vmatpush1.msra.mxu0 %v592
          %608 = vmatprep.subr.mxu0 0.0
          %609 = vmatpush1.msra.mxu0 0.0
          %610 = vmatprep.subr.mxu0 0.0
          %611 = vmatpush1.msra.mxu0 0.0
          %612 = vmatprep.subr.mxu0 0.0
          %613 = vmatpush1.msra.mxu0 0.0
          %614 = vmatprep.subr.mxu0 0.0
          %615 = vmatpush1.msra.mxu0 0.0
          %616 = vmatprep.subr.mxu0 0.0
          %617 = vmatpush1.msra.mxu0 0.0
          %618 = vmatprep.subr.mxu0 0.0
          %619 = vmatpush1.msra.mxu0 0.0
          %620 = vmatprep.subr.mxu0 0.0
          %621 = vmatpush1.msra.mxu0 0.0
          %622 = vmatprep.subr.mxu0 0.0
          %623 = vmatpush1.msra.mxu0 0.0
          %624 = vmatprep.subr.mxu0 0.0
          %625 = vmatpush1.msra.mxu0 0.0
          %626 = vmatprep.subr.mxu0 0.0
          %627 = vmatpush1.msra.mxu0 0.0
          %628 = vmatprep.subr.mxu0 0.0
          %629 = vmatpush1.msra.mxu0 0.0
          %630 = vmatprep.subr.mxu0 0.0
          %631 = vmatpush1.msra.mxu0 0.0
          %632 = vmatprep.subr.mxu0 0.0
          %633 = vmatpush1.msra.mxu0 0.0
          %634 = vmatprep.subr.mxu0 0.0
          %635 = vmatpush1.msra.mxu0 0.0
          %636 = vmatprep.subr.mxu0 0.0
          %637 = vmatpush1.msra.mxu0 0.0
          %638 = vmatprep.subr.mxu0 0.0
          %639 = vmatpush1.msra.mxu0 0.0
          %640 = vmatprep.subr.mxu0 0.0
          %641 = vmatpush1.msra.mxu0 0.0
          %642 = vmatprep.subr.mxu0 0.0
          %643 = vmatpush1.msra.mxu0 0.0
          %644 = vmatprep.subr.mxu0 0.0
          %645 = vmatpush1.msra.mxu0 0.0
          %646 = vmatprep.subr.mxu0 0.0
          %647 = vmatpush1.msra.mxu0 0.0
          %648 = vmatprep.subr.mxu0 0.0
          %649 = vmatpush1.msra.mxu0 0.0
          %650 = vmatprep.subr.mxu0 0.0
          %651 = vmatpush1.msra.mxu0 0.0
          %652 = vmatprep.subr.mxu0 0.0
          %653 = vmatpush1.msra.mxu0 0.0
          %654 = vmatprep.subr.mxu0 0.0
          %655 = vmatpush1.msra.mxu0 0.0
          %656 = vmatprep.subr.mxu0 0.0
          %657 = vmatpush1.msra.mxu0 0.0
          %658 = vmatprep.subr.mxu0 0.0
          %659 = vmatpush1.msra.mxu0 0.0
          %660 = vmatprep.subr.mxu0 0.0
          %661 = vmatpush1.msra.mxu0 0.0
          %662 = vmatprep.subr.mxu0 0.0
          %663 = vmatpush1.msra.mxu0 0.0
          %664 = vmatprep.mubr.f32.mxu0 0.0
          %665 = vmatmul.mubr.f32.gmra.mrb[0].mxu0 %v509
          %v666 = vpop.f32.mrb[0].mxu0
          %v667 = vadd.f32 %v598, %v666
          %v668 = vpop.f32.mrb[0].mxu0
          %669 = vmatprep.mubr.f32.mxu0 0.0
          %670 = vmatmul.mubr.f32.gmra.mrb[0].mxu0 %v512
          %v671 = vpop.f32.mrb[0].mxu0
          %v672 = vadd.f32 %v598, %v671
          %v673 = vpop.f32.mrb[0].mxu0
          %674 = vdwg.mxu0
          %677 = vrot.lane.b32.xlu0 %v581, 120
          %v678 = vpop.permute.xlu0 %677
          %679 = vrot.lane.b32.xlu0 %v586, 120
          %v680 = vpop.permute.xlu0 %679
          %683 = vrot.lane.b32.xlu0 %v581, 112
          %v684 = vpop.permute.xlu0 %683
          %685 = vrot.lane.b32.xlu0 %v586, 112
          %v686 = vpop.permute.xlu0 %685
          %689 = vrot.lane.b32.xlu0 %v581, 104
          %v690 = vpop.permute.xlu0 %689
          %691 = vrot.lane.b32.xlu0 %v586, 104
          %v692 = vpop.permute.xlu0 %691
          %v695 = vcombine.low %v581, %v684
          %v696 = vcombine.high %v581, %v684
          %v698 = vunpack.c.l.s4 1983009808
          %v699 = vunpack.c.0.s8 %v698
          %v700 = vlaneseq
          %v701 = vshrl.u32 %v700, 7
          %v702 = vsub.s32 %v699, %v701
          %v703 = vrot.slane %v695, %v702
          %v705 = vunpack.c.l.s4 1983009808
          %v706 = vunpack.c.0.s8 %v705
          %v707 = vlaneseq
          %v708 = vshrl.u32 %v707, 7
          %v709 = vsub.s32 %v706, %v708
          %v710 = vrot.slane %v696, %v709
          %v711 = vcombine.low %v678, %v690
          %v712 = vcombine.high %v678, %v690
          %v714 = vunpack.c.l.s4 1983009808
          %v715 = vunpack.c.0.s8 %v714
          %v716 = vlaneseq
          %v717 = vshrl.u32 %v716, 7
          %v718 = vsub.s32 %v715, %v717
          %v719 = vrot.slane %v711, %v718
          %v721 = vunpack.c.l.s4 1983009808
          %v722 = vunpack.c.0.s8 %v721
          %v723 = vlaneseq
          %v724 = vshrl.u32 %v723, 7
          %v725 = vsub.s32 %v722, %v724
          %v726 = vrot.slane %v712, %v725
          %v727 = vcombine.low %v703, %v719
          %v728 = vcombine.high %v703, %v719
          %v730 = vunpack.c.l.s4 1934713408
          %v731 = vunpack.c.0.s8 %v730
          %v732 = vlaneseq
          %v733 = vshrl.u32 %v732, 7
          %v734 = vsub.s32 %v731, %v733
          %v735 = vrot.slane %v727, %v734
          %v737 = vunpack.c.l.s4 1934713408
          %v738 = vunpack.c.0.s8 %v737
          %v739 = vlaneseq
          %v740 = vshrl.u32 %v739, 7
          %v741 = vsub.s32 %v738, %v740
          %v742 = vrot.slane %v728, %v741
          %v743 = vcombine.low %v710, %v726
          %v744 = vcombine.high %v710, %v726
          %v746 = vunpack.c.l.s4 1934713408
          %v747 = vunpack.c.0.s8 %v746
          %v748 = vlaneseq
          %v749 = vshrl.u32 %v748, 7
          %v750 = vsub.s32 %v747, %v749
          %v751 = vrot.slane %v743, %v750
          %v753 = vunpack.c.l.s4 1934713408
          %v754 = vunpack.c.0.s8 %v753
          %v755 = vlaneseq
          %v756 = vshrl.u32 %v755, 7
          %v757 = vsub.s32 %v754, %v756
          %v758 = vrot.slane %v744, %v757
          %v759 = vcombine.high %v735, 0.0
          %v760 = vcombine.high %v742, 0.0
          %v761 = vcombine.high %v751, 0.0
          %v762 = vcombine.high %v758, 0.0
          %v763 = vcombine.low %v586, %v686
          %v764 = vcombine.high %v586, %v686
          %v766 = vunpack.c.l.s4 1983009808
          %v767 = vunpack.c.0.s8 %v766
          %v768 = vlaneseq
          %v769 = vshrl.u32 %v768, 7
          %v770 = vsub.s32 %v767, %v769
          %v771 = vrot.slane %v763, %v770
          %v773 = vunpack.c.l.s4 1983009808
          %v774 = vunpack.c.0.s8 %v773
          %v775 = vlaneseq
          %v776 = vshrl.u32 %v775, 7
          %v777 = vsub.s32 %v774, %v776
          %v778 = vrot.slane %v764, %v777
          %v779 = vcombine.low %v680, %v692
          %v780 = vcombine.high %v680, %v692
          %v782 = vunpack.c.l.s4 1983009808
          %v783 = vunpack.c.0.s8 %v782
          %v784 = vlaneseq
          %v785 = vshrl.u32 %v784, 7
          %v786 = vsub.s32 %v783, %v785
          %v787 = vrot.slane %v779, %v786
          %v789 = vunpack.c.l.s4 1983009808
          %v790 = vunpack.c.0.s8 %v789
          %v791 = vlaneseq
          %v792 = vshrl.u32 %v791, 7
          %v793 = vsub.s32 %v790, %v792
          %v794 = vrot.slane %v780, %v793
          %v795 = vcombine.low %v771, %v787
          %v796 = vcombine.high %v771, %v787
          %v798 = vunpack.c.l.s4 1934713408
          %v799 = vunpack.c.0.s8 %v798
          %v800 = vlaneseq
          %v801 = vshrl.u32 %v800, 7
          %v802 = vsub.s32 %v799, %v801
          %v803 = vrot.slane %v795, %v802
          %v805 = vunpack.c.l.s4 1934713408
          %v806 = vunpack.c.0.s8 %v805
          %v807 = vlaneseq
          %v808 = vshrl.u32 %v807, 7
          %v809 = vsub.s32 %v806, %v808
          %v810 = vrot.slane %v796, %v809
          %v811 = vcombine.low %v778, %v794
          %v812 = vcombine.high %v778, %v794
          %v814 = vunpack.c.l.s4 1934713408
          %v815 = vunpack.c.0.s8 %v814
          %v816 = vlaneseq
          %v817 = vshrl.u32 %v816, 7
          %v818 = vsub.s32 %v815, %v817
          %v819 = vrot.slane %v811, %v818
          %v821 = vunpack.c.l.s4 1934713408
          %v822 = vunpack.c.0.s8 %v821
          %v823 = vlaneseq
          %v824 = vshrl.u32 %v823, 7
          %v825 = vsub.s32 %v822, %v824
          %v826 = vrot.slane %v812, %v825
          %v827 = vcombine.high %v803, 0.0
          %v828 = vcombine.high %v810, 0.0
          %v829 = vcombine.high %v819, 0.0
          %v830 = vcombine.high %v826, 0.0
          %v831 = vcombine.low %v735, %v742
          %v833 = vunpack.c.l.s4 1983009808
          %v834 = vunpack.c.0.s8 %v833
          %v835 = vlaneseq
          %v836 = vshrl.u32 %v835, 7
          %v837 = vsub.s32 %v834, %v836
          %v838 = vrot.slane %v831, %v837
          %v839 = vcombine.low %v759, %v760
          %v841 = vunpack.c.l.s4 1983009808
          %v842 = vunpack.c.0.s8 %v841
          %v843 = vlaneseq
          %v844 = vshrl.u32 %v843, 7
          %v845 = vsub.s32 %v842, %v844
          %v846 = vrot.slane %v839, %v845
          %v847 = vcombine.low %v751, %v758
          %v849 = vunpack.c.l.s4 1983009808
          %v850 = vunpack.c.0.s8 %v849
          %v851 = vlaneseq
          %v852 = vshrl.u32 %v851, 7
          %v853 = vsub.s32 %v850, %v852
          %v854 = vrot.slane %v847, %v853
          %v855 = vcombine.low %v761, %v762
          %v857 = vunpack.c.l.s4 1983009808
          %v858 = vunpack.c.0.s8 %v857
          %v859 = vlaneseq
          %v860 = vshrl.u32 %v859, 7
          %v861 = vsub.s32 %v858, %v860
          %v862 = vrot.slane %v855, %v861
          %v863 = vcombine.low %v838, %v846
          %v864 = vcombine.high %v838, %v846
          %v866 = vunpack.c.l.s4 1934713408
          %v867 = vunpack.c.0.s8 %v866
          %v868 = vlaneseq
          %v869 = vshrl.u32 %v868, 7
          %v870 = vsub.s32 %v867, %v869
          %v871 = vrot.slane %v863, %v870
          %v873 = vunpack.c.l.s4 1934713408
          %v874 = vunpack.c.0.s8 %v873
          %v875 = vlaneseq
          %v876 = vshrl.u32 %v875, 7
          %v877 = vsub.s32 %v874, %v876
          %v878 = vrot.slane %v864, %v877
          %v879 = vcombine.low %v854, %v862
          %v880 = vcombine.high %v854, %v862
          %v882 = vunpack.c.l.s4 1934713408
          %v883 = vunpack.c.0.s8 %v882
          %v884 = vlaneseq
          %v885 = vshrl.u32 %v884, 7
          %v886 = vsub.s32 %v883, %v885
          %v887 = vrot.slane %v879, %v886
          %v889 = vunpack.c.l.s4 1934713408
          %v890 = vunpack.c.0.s8 %v889
          %v891 = vlaneseq
          %v892 = vshrl.u32 %v891, 7
          %v893 = vsub.s32 %v890, %v892
          %v894 = vrot.slane %v880, %v893
          %v895 = vcombine.low %v871, %v887
          %v896 = vcombine.high %v871, %v887
          %v897 = vcombine.low %v878, %v894
          %v898 = vcombine.high %v878, %v894
          %v899 = vcombine.low %v803, %v810
          %v901 = vunpack.c.l.s4 1983009808
          %v902 = vunpack.c.0.s8 %v901
          %v903 = vlaneseq
          %v904 = vshrl.u32 %v903, 7
          %v905 = vsub.s32 %v902, %v904
          %v906 = vrot.slane %v899, %v905
          %v907 = vcombine.low %v827, %v828
          %v909 = vunpack.c.l.s4 1983009808
          %v910 = vunpack.c.0.s8 %v909
          %v911 = vlaneseq
          %v912 = vshrl.u32 %v911, 7
          %v913 = vsub.s32 %v910, %v912
          %v914 = vrot.slane %v907, %v913
          %v915 = vcombine.low %v819, %v826
          %v917 = vunpack.c.l.s4 1983009808
          %v918 = vunpack.c.0.s8 %v917
          %v919 = vlaneseq
          %v920 = vshrl.u32 %v919, 7
          %v921 = vsub.s32 %v918, %v920
          %v922 = vrot.slane %v915, %v921
          %v923 = vcombine.low %v829, %v830
          %v925 = vunpack.c.l.s4 1983009808
          %v926 = vunpack.c.0.s8 %v925
          %v927 = vlaneseq
          %v928 = vshrl.u32 %v927, 7
          %v929 = vsub.s32 %v926, %v928
          %v930 = vrot.slane %v923, %v929
          %v931 = vcombine.low %v906, %v914
          %v932 = vcombine.high %v906, %v914
          %v934 = vunpack.c.l.s4 1934713408
          %v935 = vunpack.c.0.s8 %v934
          %v936 = vlaneseq
          %v937 = vshrl.u32 %v936, 7
          %v938 = vsub.s32 %v935, %v937
          %v939 = vrot.slane %v931, %v938
          %v941 = vunpack.c.l.s4 1934713408
          %v942 = vunpack.c.0.s8 %v941
          %v943 = vlaneseq
          %v944 = vshrl.u32 %v943, 7
          %v945 = vsub.s32 %v942, %v944
          %v946 = vrot.slane %v932, %v945
          %v947 = vcombine.low %v922, %v930
          %v948 = vcombine.high %v922, %v930
          %v950 = vunpack.c.l.s4 1934713408
          %v951 = vunpack.c.0.s8 %v950
          %v952 = vlaneseq
          %v953 = vshrl.u32 %v952, 7
          %v954 = vsub.s32 %v951, %v953
          %v955 = vrot.slane %v947, %v954
          %v957 = vunpack.c.l.s4 1934713408
          %v958 = vunpack.c.0.s8 %v957
          %v959 = vlaneseq
          %v960 = vshrl.u32 %v959, 7
          %v961 = vsub.s32 %v958, %v960
          %v962 = vrot.slane %v948, %v961
          %v963 = vcombine.low %v939, %v955
          %v964 = vcombine.high %v939, %v955
          %v965 = vcombine.low %v946, %v962
          %v966 = vcombine.high %v946, %v962
          %vm967 = vcmask 64512
          %968 = vst.msk [vmem:[#allocation2] sm:$0xff] %vm967, %v895
          %969 = vst.msk [vmem:[#allocation2 + $0x8] sm:$0xff] %vm967, %v963
          %970 = vst.msk [vmem:[#allocation2 + $0x10] sm:$0xff] %vm967, %v896
          %971 = vst.msk [vmem:[#allocation2 + $0x18] sm:$0xff] %vm967, %v964
          %972 = vst.msk [vmem:[#allocation2 + $0x20] sm:$0xff] %vm967, %v897
          %973 = vst.msk [vmem:[#allocation2 + $0x28] sm:$0xff] %vm967, %v965
          %974 = vst.msk [vmem:[#allocation2 + $0x30] sm:$0xff] %vm967, %v898
          %975 = vst.msk [vmem:[#allocation2 + $0x38] sm:$0xff] %vm967, %v966
          %978 = vrot.lane.b32.xlu0 %v667, 120
          %v979 = vpop.permute.xlu0 %978
          %980 = vrot.lane.b32.xlu0 %v672, 120
          %v981 = vpop.permute.xlu0 %980
          %984 = vrot.lane.b32.xlu0 %v667, 112
          %v985 = vpop.permute.xlu0 %984
          %986 = vrot.lane.b32.xlu0 %v672, 112
          %v987 = vpop.permute.xlu0 %986
          %990 = vrot.lane.b32.xlu0 %v667, 104
          %v991 = vpop.permute.xlu0 %990
          %992 = vrot.lane.b32.xlu0 %v672, 104
          %v993 = vpop.permute.xlu0 %992
          %v996 = vcombine.low %v667, %v985
          %v997 = vcombine.high %v667, %v985
          %v999 = vunpack.c.l.s4 1983009808
          %v1000 = vunpack.c.0.s8 %v999
          %v1001 = vlaneseq
          %v1002 = vshrl.u32 %v1001, 7
          %v1003 = vsub.s32 %v1000, %v1002
          %v1004 = vrot.slane %v996, %v1003
          %v1006 = vunpack.c.l.s4 1983009808
          %v1007 = vunpack.c.0.s8 %v1006
          %v1008 = vlaneseq
          %v1009 = vshrl.u32 %v1008, 7
          %v1010 = vsub.s32 %v1007, %v1009
          %v1011 = vrot.slane %v997, %v1010
          %v1012 = vcombine.low %v979, %v991
          %v1013 = vcombine.high %v979, %v991
          %v1015 = vunpack.c.l.s4 1983009808
          %v1016 = vunpack.c.0.s8 %v1015
          %v1017 = vlaneseq
          %v1018 = vshrl.u32 %v1017, 7
          %v1019 = vsub.s32 %v1016, %v1018
          %v1020 = vrot.slane %v1012, %v1019
          %v1022 = vunpack.c.l.s4 1983009808
          %v1023 = vunpack.c.0.s8 %v1022
          %v1024 = vlaneseq
          %v1025 = vshrl.u32 %v1024, 7
          %v1026 = vsub.s32 %v1023, %v1025
          %v1027 = vrot.slane %v1013, %v1026
          %v1028 = vcombine.low %v1004, %v1020
          %v1029 = vcombine.high %v1004, %v1020
          %v1031 = vunpack.c.l.s4 1934713408
          %v1032 = vunpack.c.0.s8 %v1031
          %v1033 = vlaneseq
          %v1034 = vshrl.u32 %v1033, 7
          %v1035 = vsub.s32 %v1032, %v1034
          %v1036 = vrot.slane %v1028, %v1035
          %v1038 = vunpack.c.l.s4 1934713408
          %v1039 = vunpack.c.0.s8 %v1038
          %v1040 = vlaneseq
          %v1041 = vshrl.u32 %v1040, 7
          %v1042 = vsub.s32 %v1039, %v1041
          %v1043 = vrot.slane %v1029, %v1042
          %v1044 = vcombine.low %v1011, %v1027
          %v1045 = vcombine.high %v1011, %v1027
          %v1047 = vunpack.c.l.s4 1934713408
          %v1048 = vunpack.c.0.s8 %v1047
          %v1049 = vlaneseq
          %v1050 = vshrl.u32 %v1049, 7
          %v1051 = vsub.s32 %v1048, %v1050
          %v1052 = vrot.slane %v1044, %v1051
          %v1054 = vunpack.c.l.s4 1934713408
          %v1055 = vunpack.c.0.s8 %v1054
          %v1056 = vlaneseq
          %v1057 = vshrl.u32 %v1056, 7
          %v1058 = vsub.s32 %v1055, %v1057
          %v1059 = vrot.slane %v1045, %v1058
          %v1060 = vcombine.high %v1036, 0.0
          %v1061 = vcombine.high %v1043, 0.0
          %v1062 = vcombine.high %v1052, 0.0
          %v1063 = vcombine.high %v1059, 0.0
          %v1064 = vcombine.low %v672, %v987
          %v1065 = vcombine.high %v672, %v987
          %v1067 = vunpack.c.l.s4 1983009808
          %v1068 = vunpack.c.0.s8 %v1067
          %v1069 = vlaneseq
          %v1070 = vshrl.u32 %v1069, 7
          %v1071 = vsub.s32 %v1068, %v1070
          %v1072 = vrot.slane %v1064, %v1071
          %v1074 = vunpack.c.l.s4 1983009808
          %v1075 = vunpack.c.0.s8 %v1074
          %v1076 = vlaneseq
          %v1077 = vshrl.u32 %v1076, 7
          %v1078 = vsub.s32 %v1075, %v1077
          %v1079 = vrot.slane %v1065, %v1078
          %v1080 = vcombine.low %v981, %v993
          %v1081 = vcombine.high %v981, %v993
          %v1083 = vunpack.c.l.s4 1983009808
          %v1084 = vunpack.c.0.s8 %v1083
          %v1085 = vlaneseq
          %v1086 = vshrl.u32 %v1085, 7
          %v1087 = vsub.s32 %v1084, %v1086
          %v1088 = vrot.slane %v1080, %v1087
          %v1090 = vunpack.c.l.s4 1983009808
          %v1091 = vunpack.c.0.s8 %v1090
          %v1092 = vlaneseq
          %v1093 = vshrl.u32 %v1092, 7
          %v1094 = vsub.s32 %v1091, %v1093
          %v1095 = vrot.slane %v1081, %v1094
          %v1096 = vcombine.low %v1072, %v1088
          %v1097 = vcombine.high %v1072, %v1088
          %v1099 = vunpack.c.l.s4 1934713408
          %v1100 = vunpack.c.0.s8 %v1099
          %v1101 = vlaneseq
          %v1102 = vshrl.u32 %v1101, 7
          %v1103 = vsub.s32 %v1100, %v1102
          %v1104 = vrot.slane %v1096, %v1103
          %v1106 = vunpack.c.l.s4 1934713408
          %v1107 = vunpack.c.0.s8 %v1106
          %v1108 = vlaneseq
          %v1109 = vshrl.u32 %v1108, 7
          %v1110 = vsub.s32 %v1107, %v1109
          %v1111 = vrot.slane %v1097, %v1110
          %v1112 = vcombine.low %v1079, %v1095
          %v1113 = vcombine.high %v1079, %v1095
          %v1115 = vunpack.c.l.s4 1934713408
          %v1116 = vunpack.c.0.s8 %v1115
          %v1117 = vlaneseq
          %v1118 = vshrl.u32 %v1117, 7
          %v1119 = vsub.s32 %v1116, %v1118
          %v1120 = vrot.slane %v1112, %v1119
          %v1122 = vunpack.c.l.s4 1934713408
          %v1123 = vunpack.c.0.s8 %v1122
          %v1124 = vlaneseq
          %v1125 = vshrl.u32 %v1124, 7
          %v1126 = vsub.s32 %v1123, %v1125
          %v1127 = vrot.slane %v1113, %v1126
          %v1128 = vcombine.high %v1104, 0.0
          %v1129 = vcombine.high %v1111, 0.0
          %v1130 = vcombine.high %v1120, 0.0
          %v1131 = vcombine.high %v1127, 0.0
          %v1132 = vcombine.low %v1036, %v1043
          %v1134 = vunpack.c.l.s4 1983009808
          %v1135 = vunpack.c.0.s8 %v1134
          %v1136 = vlaneseq
          %v1137 = vshrl.u32 %v1136, 7
          %v1138 = vsub.s32 %v1135, %v1137
          %v1139 = vrot.slane %v1132, %v1138
          %v1140 = vcombine.low %v1060, %v1061
          %v1142 = vunpack.c.l.s4 1983009808
          %v1143 = vunpack.c.0.s8 %v1142
          %v1144 = vlaneseq
          %v1145 = vshrl.u32 %v1144, 7
          %v1146 = vsub.s32 %v1143, %v1145
          %v1147 = vrot.slane %v1140, %v1146
          %v1148 = vcombine.low %v1052, %v1059
          %v1150 = vunpack.c.l.s4 1983009808
          %v1151 = vunpack.c.0.s8 %v1150
          %v1152 = vlaneseq
          %v1153 = vshrl.u32 %v1152, 7
          %v1154 = vsub.s32 %v1151, %v1153
          %v1155 = vrot.slane %v1148, %v1154
          %v1156 = vcombine.low %v1062, %v1063
          %v1158 = vunpack.c.l.s4 1983009808
          %v1159 = vunpack.c.0.s8 %v1158
          %v1160 = vlaneseq
          %v1161 = vshrl.u32 %v1160, 7
          %v1162 = vsub.s32 %v1159, %v1161
          %v1163 = vrot.slane %v1156, %v1162
          %v1164 = vcombine.low %v1139, %v1147
          %v1165 = vcombine.high %v1139, %v1147
          %v1167 = vunpack.c.l.s4 1934713408
          %v1168 = vunpack.c.0.s8 %v1167
          %v1169 = vlaneseq
          %v1170 = vshrl.u32 %v1169, 7
          %v1171 = vsub.s32 %v1168, %v1170
          %v1172 = vrot.slane %v1164, %v1171
          %v1174 = vunpack.c.l.s4 1934713408
          %v1175 = vunpack.c.0.s8 %v1174
          %v1176 = vlaneseq
          %v1177 = vshrl.u32 %v1176, 7
          %v1178 = vsub.s32 %v1175, %v1177
          %v1179 = vrot.slane %v1165, %v1178
          %v1180 = vcombine.low %v1155, %v1163
          %v1181 = vcombine.high %v1155, %v1163
          %v1183 = vunpack.c.l.s4 1934713408
          %v1184 = vunpack.c.0.s8 %v1183
          %v1185 = vlaneseq
          %v1186 = vshrl.u32 %v1185, 7
          %v1187 = vsub.s32 %v1184, %v1186
          %v1188 = vrot.slane %v1180, %v1187
          %v1190 = vunpack.c.l.s4 1934713408
          %v1191 = vunpack.c.0.s8 %v1190
          %v1192 = vlaneseq
          %v1193 = vshrl.u32 %v1192, 7
          %v1194 = vsub.s32 %v1191, %v1193
          %v1195 = vrot.slane %v1181, %v1194
          %v1196 = vcombine.low %v1172, %v1188
          %v1197 = vcombine.high %v1172, %v1188
          %v1198 = vcombine.low %v1179, %v1195
          %v1199 = vcombine.high %v1179, %v1195
          %v1200 = vcombine.low %v1104, %v1111
          %v1202 = vunpack.c.l.s4 1983009808
          %v1203 = vunpack.c.0.s8 %v1202
          %v1204 = vlaneseq
          %v1205 = vshrl.u32 %v1204, 7
          %v1206 = vsub.s32 %v1203, %v1205
          %v1207 = vrot.slane %v1200, %v1206
          %v1208 = vcombine.low %v1128, %v1129
          %v1210 = vunpack.c.l.s4 1983009808
          %v1211 = vunpack.c.0.s8 %v1210
          %v1212 = vlaneseq
          %v1213 = vshrl.u32 %v1212, 7
          %v1214 = vsub.s32 %v1211, %v1213
          %v1215 = vrot.slane %v1208, %v1214
          %v1216 = vcombine.low %v1120, %v1127
          %v1218 = vunpack.c.l.s4 1983009808
          %v1219 = vunpack.c.0.s8 %v1218
          %v1220 = vlaneseq
          %v1221 = vshrl.u32 %v1220, 7
          %v1222 = vsub.s32 %v1219, %v1221
          %v1223 = vrot.slane %v1216, %v1222
          %v1224 = vcombine.low %v1130, %v1131
          %v1226 = vunpack.c.l.s4 1983009808
          %v1227 = vunpack.c.0.s8 %v1226
          %v1228 = vlaneseq
          %v1229 = vshrl.u32 %v1228, 7
          %v1230 = vsub.s32 %v1227, %v1229
          %v1231 = vrot.slane %v1224, %v1230
          %v1232 = vcombine.low %v1207, %v1215
          %v1233 = vcombine.high %v1207, %v1215
          %v1235 = vunpack.c.l.s4 1934713408
          %v1236 = vunpack.c.0.s8 %v1235
          %v1237 = vlaneseq
          %v1238 = vshrl.u32 %v1237, 7
          %v1239 = vsub.s32 %v1236, %v1238
          %v1240 = vrot.slane %v1232, %v1239
          %v1242 = vunpack.c.l.s4 1934713408
          %v1243 = vunpack.c.0.s8 %v1242
          %v1244 = vlaneseq
          %v1245 = vshrl.u32 %v1244, 7
          %v1246 = vsub.s32 %v1243, %v1245
          %v1247 = vrot.slane %v1233, %v1246
          %v1248 = vcombine.low %v1223, %v1231
          %v1249 = vcombine.high %v1223, %v1231
          %v1251 = vunpack.c.l.s4 1934713408
          %v1252 = vunpack.c.0.s8 %v1251
          %v1253 = vlaneseq
          %v1254 = vshrl.u32 %v1253, 7
          %v1255 = vsub.s32 %v1252, %v1254
          %v1256 = vrot.slane %v1248, %v1255
          %v1258 = vunpack.c.l.s4 1934713408
          %v1259 = vunpack.c.0.s8 %v1258
          %v1260 = vlaneseq
          %v1261 = vshrl.u32 %v1260, 7
          %v1262 = vsub.s32 %v1259, %v1261
          %v1263 = vrot.slane %v1249, %v1262
          %v1264 = vcombine.low %v1240, %v1256
          %v1265 = vcombine.high %v1240, %v1256
          %v1266 = vcombine.low %v1247, %v1263
          %v1267 = vcombine.high %v1247, %v1263
          %1268 = vst.msk [vmem:[#allocation3] sm:$0xff] %vm967, %v1196
          %1269 = vst.msk [vmem:[#allocation3 + $0x8] sm:$0xff] %vm967, %v1264
          %1270 = vst.msk [vmem:[#allocation3 + $0x10] sm:$0xff] %vm967, %v1197
          %1271 = vst.msk [vmem:[#allocation3 + $0x18] sm:$0xff] %vm967, %v1265
          %1272 = vst.msk [vmem:[#allocation3 + $0x20] sm:$0xff] %vm967, %v1198
          %1273 = vst.msk [vmem:[#allocation3 + $0x28] sm:$0xff] %vm967, %v1266
          %1274 = vst.msk [vmem:[#allocation3 + $0x30] sm:$0xff] %vm967, %v1199
          %1275 = vst.msk [vmem:[#allocation3 + $0x38] sm:$0xff] %vm967, %v1267
        $region88: #{tpu_custom_call.1} parent=59 // pred_fallthru
          _
        %v1276 = vld [vmem:[%s423] sm:$0xff]
        %v1277 = vld [vmem:[#allocation9] sm:$0xff]
        %v1278 = vld [vmem:[#allocation9 + $0x8] sm:$0xff]
        %v1279 = vld [vmem:[#allocation9 + $0x10] sm:$0xff]
        %v1280 = vld [vmem:[#allocation9 + $0x18] sm:$0xff]
        %v1281 = vld [vmem:[%s3] sm:$0x1]
        %v1283 = vlaneseq
        %v1284 = vshrl.u32 %v1283, 7
        %v1285 = vsub.s32 0, %v1284
        %v1286 = vrot.slane %v1281, %v1285
        %vm1288 = vcmask 261120
        %v1290 = vsel %vm1288, %v1276, 0
        %1292 = vmatprep.subr.mxu0 0.0
        %1293 = vmatpush1.msra.mxu0 %v1277
        %1294 = vmatprep.subr.mxu0 0.0
        %1295 = vmatpush1.msra.mxu0 %v1278
        %1296 = vmatprep.subr.mxu0 0.0
        %1297 = vmatpush1.msra.mxu0 %v1279
        %1298 = vmatprep.subr.mxu0 0.0
        %1299 = vmatpush1.msra.mxu0 %v1280
        %1300 = vmatprep.subr.mxu0 0.0
        %1301 = vmatpush1.msra.mxu0 0.0
        %1302 = vmatprep.subr.mxu0 0.0
        %1303 = vmatpush1.msra.mxu0 0.0
        %1304 = vmatprep.subr.mxu0 0.0
        %1305 = vmatpush1.msra.mxu0 0.0
        %1306 = vmatprep.subr.mxu0 0.0
        %1307 = vmatpush1.msra.mxu0 0.0
        %1308 = vmatprep.subr.mxu0 0.0
        %1309 = vmatpush1.msra.mxu0 0.0
        %1310 = vmatprep.subr.mxu0 0.0
        %1311 = vmatpush1.msra.mxu0 0.0
        %1312 = vmatprep.subr.mxu0 0.0
        %1313 = vmatpush1.msra.mxu0 0.0
        %1314 = vmatprep.subr.mxu0 0.0
        %1315 = vmatpush1.msra.mxu0 0.0
        %1316 = vmatprep.subr.mxu0 0.0
        %1317 = vmatpush1.msra.mxu0 0.0
        %1318 = vmatprep.subr.mxu0 0.0
        %1319 = vmatpush1.msra.mxu0 0.0
        %1320 = vmatprep.subr.mxu0 0.0
        %1321 = vmatpush1.msra.mxu0 0.0
        %1322 = vmatprep.subr.mxu0 0.0
        %1323 = vmatpush1.msra.mxu0 0.0
        %1324 = vmatprep.subr.mxu0 0.0
        %1325 = vmatpush1.msra.mxu0 0.0
        %1326 = vmatprep.subr.mxu0 0.0
        %1327 = vmatpush1.msra.mxu0 0.0
        %1328 = vmatprep.subr.mxu0 0.0
        %1329 = vmatpush1.msra.mxu0 0.0
        %1330 = vmatprep.subr.mxu0 0.0
        %1331 = vmatpush1.msra.mxu0 0.0
        %1332 = vmatprep.subr.mxu0 0.0
        %1333 = vmatpush1.msra.mxu0 0.0
        %1334 = vmatprep.subr.mxu0 0.0
        %1335 = vmatpush1.msra.mxu0 0.0
        %1336 = vmatprep.subr.mxu0 0.0
        %1337 = vmatpush1.msra.mxu0 0.0
        %1338 = vmatprep.subr.mxu0 0.0
        %1339 = vmatpush1.msra.mxu0 0.0
        %1340 = vmatprep.subr.mxu0 0.0
        %1341 = vmatpush1.msra.mxu0 0.0
        %1342 = vmatprep.subr.mxu0 0.0
        %1343 = vmatpush1.msra.mxu0 0.0
        %1344 = vmatprep.subr.mxu0 0.0
        %1345 = vmatpush1.msra.mxu0 0.0
        %1346 = vmatprep.subr.mxu0 0.0
        %1347 = vmatpush1.msra.mxu0 0.0
        %1348 = vmatprep.subr.mxu0 0.0
        %1349 = vmatpush1.msra.mxu0 0.0
        %1350 = vmatprep.subr.mxu0 0.0
        %1351 = vmatpush1.msra.mxu0 0.0
        %1352 = vmatprep.subr.mxu0 0.0
        %1353 = vmatpush1.msra.mxu0 0.0
        %1354 = vmatprep.subr.mxu0 0.0
        %1355 = vmatpush1.msra.mxu0 0.0
        %1356 = vmatprep.mubr.f32.mxu0 0.0
        %1357 = vmatmul.mubr.f32.gmra.mrb[0].mxu0 %v1290
        %v1358 = vpop.f32.mrb[0].mxu0
        %v1359 = vadd.f32 %v1286, %v1358
        %v1360 = vpop.f32.mrb[0].mxu0
        %1361 = vdwg.mxu0
        %1363 = vrot.lane.b32.xlu0 %v1359, 120
        %v1364 = vpop.permute.xlu0 %1363
        %1366 = vrot.lane.b32.xlu0 %v1359, 112
        %v1367 = vpop.permute.xlu0 %1366
        %1369 = vrot.lane.b32.xlu0 %v1359, 104
        %v1370 = vpop.permute.xlu0 %1369
        %v1372 = vcombine.low %v1359, %v1367
        %v1373 = vcombine.high %v1359, %v1367
        %v1375 = vunpack.c.l.s4 1983009808
        %v1376 = vunpack.c.0.s8 %v1375
        %v1377 = vlaneseq
        %v1378 = vshrl.u32 %v1377, 7
        %v1379 = vsub.s32 %v1376, %v1378
        %v1380 = vrot.slane %v1372, %v1379
        %v1382 = vunpack.c.l.s4 1983009808
        %v1383 = vunpack.c.0.s8 %v1382
        %v1384 = vlaneseq
        %v1385 = vshrl.u32 %v1384, 7
        %v1386 = vsub.s32 %v1383, %v1385
        %v1387 = vrot.slane %v1373, %v1386
        %v1388 = vcombine.low %v1364, %v1370
        %v1389 = vcombine.high %v1364, %v1370
        %v1391 = vunpack.c.l.s4 1983009808
        %v1392 = vunpack.c.0.s8 %v1391
        %v1393 = vlaneseq
        %v1394 = vshrl.u32 %v1393, 7
        %v1395 = vsub.s32 %v1392, %v1394
        %v1396 = vrot.slane %v1388, %v1395
        %v1398 = vunpack.c.l.s4 1983009808
        %v1399 = vunpack.c.0.s8 %v1398
        %v1400 = vlaneseq
        %v1401 = vshrl.u32 %v1400, 7
        %v1402 = vsub.s32 %v1399, %v1401
        %v1403 = vrot.slane %v1389, %v1402
        %v1404 = vcombine.low %v1380, %v1396
        %v1405 = vcombine.high %v1380, %v1396
        %v1407 = vunpack.c.l.s4 1934713408
        %v1408 = vunpack.c.0.s8 %v1407
        %v1409 = vlaneseq
        %v1410 = vshrl.u32 %v1409, 7
        %v1411 = vsub.s32 %v1408, %v1410
        %v1412 = vrot.slane %v1404, %v1411
        %v1414 = vunpack.c.l.s4 1934713408
        %v1415 = vunpack.c.0.s8 %v1414
        %v1416 = vlaneseq
        %v1417 = vshrl.u32 %v1416, 7
        %v1418 = vsub.s32 %v1415, %v1417
        %v1419 = vrot.slane %v1405, %v1418
        %v1420 = vcombine.low %v1387, %v1403
        %v1421 = vcombine.high %v1387, %v1403
        %v1423 = vunpack.c.l.s4 1934713408
        %v1424 = vunpack.c.0.s8 %v1423
        %v1425 = vlaneseq
        %v1426 = vshrl.u32 %v1425, 7
        %v1427 = vsub.s32 %v1424, %v1426
        %v1428 = vrot.slane %v1420, %v1427
        %v1430 = vunpack.c.l.s4 1934713408
        %v1431 = vunpack.c.0.s8 %v1430
        %v1432 = vlaneseq
        %v1433 = vshrl.u32 %v1432, 7
        %v1434 = vsub.s32 %v1431, %v1433
        %v1435 = vrot.slane %v1421, %v1434
        %v1436 = vcombine.high %v1412, 0.0
        %v1437 = vcombine.high %v1419, 0.0
        %v1438 = vcombine.high %v1428, 0.0
        %v1439 = vcombine.high %v1435, 0.0
        %v1440 = vcombine.low %v1412, %v1419
        %v1442 = vunpack.c.l.s4 1983009808
        %v1443 = vunpack.c.0.s8 %v1442
        %v1444 = vlaneseq
        %v1445 = vshrl.u32 %v1444, 7
        %v1446 = vsub.s32 %v1443, %v1445
        %v1447 = vrot.slane %v1440, %v1446
        %v1448 = vcombine.low %v1436, %v1437
        %v1450 = vunpack.c.l.s4 1983009808
        %v1451 = vunpack.c.0.s8 %v1450
        %v1452 = vlaneseq
        %v1453 = vshrl.u32 %v1452, 7
        %v1454 = vsub.s32 %v1451, %v1453
        %v1455 = vrot.slane %v1448, %v1454
        %v1456 = vcombine.low %v1428, %v1435
        %v1458 = vunpack.c.l.s4 1983009808
        %v1459 = vunpack.c.0.s8 %v1458
        %v1460 = vlaneseq
        %v1461 = vshrl.u32 %v1460, 7
        %v1462 = vsub.s32 %v1459, %v1461
        %v1463 = vrot.slane %v1456, %v1462
        %v1464 = vcombine.low %v1438, %v1439
        %v1466 = vunpack.c.l.s4 1983009808
        %v1467 = vunpack.c.0.s8 %v1466
        %v1468 = vlaneseq
        %v1469 = vshrl.u32 %v1468, 7
        %v1470 = vsub.s32 %v1467, %v1469
        %v1471 = vrot.slane %v1464, %v1470
        %v1472 = vcombine.low %v1447, %v1455
        %v1473 = vcombine.high %v1447, %v1455
        %v1475 = vunpack.c.l.s4 1934713408
        %v1476 = vunpack.c.0.s8 %v1475
        %v1477 = vlaneseq
        %v1478 = vshrl.u32 %v1477, 7
        %v1479 = vsub.s32 %v1476, %v1478
        %v1480 = vrot.slane %v1472, %v1479
        %v1482 = vunpack.c.l.s4 1934713408
        %v1483 = vunpack.c.0.s8 %v1482
        %v1484 = vlaneseq
        %v1485 = vshrl.u32 %v1484, 7
        %v1486 = vsub.s32 %v1483, %v1485
        %v1487 = vrot.slane %v1473, %v1486
        %v1488 = vcombine.low %v1463, %v1471
        %v1489 = vcombine.high %v1463, %v1471
        %v1491 = vunpack.c.l.s4 1934713408
        %v1492 = vunpack.c.0.s8 %v1491
        %v1493 = vlaneseq
        %v1494 = vshrl.u32 %v1493, 7
        %v1495 = vsub.s32 %v1492, %v1494
        %v1496 = vrot.slane %v1488, %v1495
        %v1498 = vunpack.c.l.s4 1934713408
        %v1499 = vunpack.c.0.s8 %v1498
        %v1500 = vlaneseq
        %v1501 = vshrl.u32 %v1500, 7
        %v1502 = vsub.s32 %v1499, %v1501
        %v1503 = vrot.slane %v1489, %v1502
        %v1504 = vcombine.low %v1480, %v1496
        %v1505 = vcombine.high %v1480, %v1496
        %v1506 = vcombine.low %v1487, %v1503
        %v1507 = vcombine.high %v1487, %v1503
        %v1508 = vld [vmem:[#allocation2] sm:$0xff]
        %v1509 = vld [vmem:[#allocation2 + $0x8] sm:$0xff]
        %v1510 = vld [vmem:[#allocation2 + $0x10] sm:$0xff]
        %v1511 = vld [vmem:[#allocation2 + $0x18] sm:$0xff]
        %v1512 = vld [vmem:[#allocation2 + $0x20] sm:$0xff]
        %v1513 = vld [vmem:[#allocation2 + $0x28] sm:$0xff]
        %v1514 = vld [vmem:[#allocation2 + $0x30] sm:$0xff]
        %v1515 = vld [vmem:[#allocation2 + $0x38] sm:$0xff]
        %v1516 = vld [vmem:[#allocation3] sm:$0xff]
        %v1517 = vld [vmem:[#allocation3 + $0x8] sm:$0xff]
        %v1518 = vld [vmem:[#allocation3 + $0x10] sm:$0xff]
        %v1519 = vld [vmem:[#allocation3 + $0x18] sm:$0xff]
        %v1520 = vld [vmem:[#allocation3 + $0x20] sm:$0xff]
        %v1521 = vld [vmem:[#allocation3 + $0x28] sm:$0xff]
        %v1522 = vld [vmem:[#allocation3 + $0x30] sm:$0xff]
        %v1523 = vld [vmem:[#allocation3 + $0x38] sm:$0xff]
        %vm1524 = vcmask 64512
        %v1526 = vsel %vm1524, %v1504, 0
        %v1529 = vsel %vm1524, %v1508, 0
        %v1532 = vsel %vm1524, %v1509, 0
        %1534 = vmatprep.subr.mxu0 0.0
        %1535 = vmatpush1.xpose.msra.mxu0 %v1529
        %1536 = vmatprep.subr.mxu0 0.0
        %1537 = vmatpush1.xpose.msra.mxu0 %v1532
        %1538 = vmatprep.subr.mxu0 0.0
        %1539 = vmatpush1.xpose.msra.mxu0 0.0
        %1540 = vmatprep.subr.mxu0 0.0
        %1541 = vmatpush1.xpose.msra.mxu0 0.0
        %1542 = vmatprep.subr.mxu0 0.0
        %1543 = vmatpush1.xpose.msra.mxu0 0.0
        %1544 = vmatprep.subr.mxu0 0.0
        %1545 = vmatpush1.xpose.msra.mxu0 0.0
        %1546 = vmatprep.subr.mxu0 0.0
        %1547 = vmatpush1.xpose.msra.mxu0 0.0
        %1548 = vmatprep.subr.mxu0 0.0
        %1549 = vmatpush1.xpose.msra.mxu0 0.0
        %1550 = vmatprep.subr.mxu0 0.0
        %1551 = vmatpush1.xpose.msra.mxu0 0.0
        %1552 = vmatprep.subr.mxu0 0.0
        %1553 = vmatpush1.xpose.msra.mxu0 0.0
        %1554 = vmatprep.subr.mxu0 0.0
        %1555 = vmatpush1.xpose.msra.mxu0 0.0
        %1556 = vmatprep.subr.mxu0 0.0
        %1557 = vmatpush1.xpose.msra.mxu0 0.0
        %1558 = vmatprep.subr.mxu0 0.0
        %1559 = vmatpush1.xpose.msra.mxu0 0.0
        %1560 = vmatprep.subr.mxu0 0.0
        %1561 = vmatpush1.xpose.msra.mxu0 0.0
        %1562 = vmatprep.subr.mxu0 0.0
        %1563 = vmatpush1.xpose.msra.mxu0 0.0
        %1564 = vmatprep.subr.mxu0 0.0
        %1565 = vmatpush1.xpose.msra.mxu0 0.0
        %1566 = vmatprep.subr.mxu0 0.0
        %1567 = vmatpush1.xpose.msra.mxu0 0.0
        %1568 = vmatprep.subr.mxu0 0.0
        %1569 = vmatpush1.xpose.msra.mxu0 0.0
        %1570 = vmatprep.subr.mxu0 0.0
        %1571 = vmatpush1.xpose.msra.mxu0 0.0
        %1572 = vmatprep.subr.mxu0 0.0
        %1573 = vmatpush1.xpose.msra.mxu0 0.0
        %1574 = vmatprep.subr.mxu0 0.0
        %1575 = vmatpush1.xpose.msra.mxu0 0.0
        %1576 = vmatprep.subr.mxu0 0.0
        %1577 = vmatpush1.xpose.msra.mxu0 0.0
        %1578 = vmatprep.subr.mxu0 0.0
        %1579 = vmatpush1.xpose.msra.mxu0 0.0
        %1580 = vmatprep.subr.mxu0 0.0
        %1581 = vmatpush1.xpose.msra.mxu0 0.0
        %1582 = vmatprep.subr.mxu0 0.0
        %1583 = vmatpush1.xpose.msra.mxu0 0.0
        %1584 = vmatprep.subr.mxu0 0.0
        %1585 = vmatpush1.xpose.msra.mxu0 0.0
        %1586 = vmatprep.subr.mxu0 0.0
        %1587 = vmatpush1.xpose.msra.mxu0 0.0
        %1588 = vmatprep.subr.mxu0 0.0
        %1589 = vmatpush1.xpose.msra.mxu0 0.0
        %1590 = vmatprep.subr.mxu0 0.0
        %1591 = vmatpush1.xpose.msra.mxu0 0.0
        %1592 = vmatprep.subr.mxu0 0.0
        %1593 = vmatpush1.xpose.msra.mxu0 0.0
        %1594 = vmatprep.subr.mxu0 0.0
        %1595 = vmatpush1.xpose.msra.mxu0 0.0
        %1596 = vmatprep.subr.mxu0 0.0
        %1597 = vmatpush1.xpose.msra.mxu0 0.0
        %1598 = vmatprep.mubr.f32.mxu0 0.0
        %1599 = vmatmul.mubr.f32.gmra.mrb[0].mxu0 %v1526
        %v1600 = vpop.f32.mrb[0].mxu0
        %v1601 = vadd.f32 0.0, %v1600
        %v1602 = vpop.f32.mrb[0].mxu0
        %1603 = vdwg.mxu0
        %v1605 = vsel %vm1524, %v1505, 0
        %v1608 = vsel %vm1524, %v1510, 0
        %v1611 = vsel %vm1524, %v1511, 0
        %1613 = vmatprep.subr.mxu0 0.0
        %1614 = vmatpush1.xpose.msra.mxu0 %v1608
        %1615 = vmatprep.subr.mxu0 0.0
        %1616 = vmatpush1.xpose.msra.mxu0 %v1611
        %1617 = vmatprep.subr.mxu0 0.0
        %1618 = vmatpush1.xpose.msra.mxu0 0.0
        %1619 = vmatprep.subr.mxu0 0.0
        %1620 = vmatpush1.xpose.msra.mxu0 0.0
        %1621 = vmatprep.subr.mxu0 0.0
        %1622 = vmatpush1.xpose.msra.mxu0 0.0
        %1623 = vmatprep.subr.mxu0 0.0
        %1624 = vmatpush1.xpose.msra.mxu0 0.0
        %1625 = vmatprep.subr.mxu0 0.0
        %1626 = vmatpush1.xpose.msra.mxu0 0.0
        %1627 = vmatprep.subr.mxu0 0.0
        %1628 = vmatpush1.xpose.msra.mxu0 0.0
        %1629 = vmatprep.subr.mxu0 0.0
        %1630 = vmatpush1.xpose.msra.mxu0 0.0
        %1631 = vmatprep.subr.mxu0 0.0
        %1632 = vmatpush1.xpose.msra.mxu0 0.0
        %1633 = vmatprep.subr.mxu0 0.0
        %1634 = vmatpush1.xpose.msra.mxu0 0.0
        %1635 = vmatprep.subr.mxu0 0.0
        %1636 = vmatpush1.xpose.msra.mxu0 0.0
        %1637 = vmatprep.subr.mxu0 0.0
        %1638 = vmatpush1.xpose.msra.mxu0 0.0
        %1639 = vmatprep.subr.mxu0 0.0
        %1640 = vmatpush1.xpose.msra.mxu0 0.0
        %1641 = vmatprep.subr.mxu0 0.0
        %1642 = vmatpush1.xpose.msra.mxu0 0.0
        %1643 = vmatprep.subr.mxu0 0.0
        %1644 = vmatpush1.xpose.msra.mxu0 0.0
        %1645 = vmatprep.subr.mxu0 0.0
        %1646 = vmatpush1.xpose.msra.mxu0 0.0
        %1647 = vmatprep.subr.mxu0 0.0
        %1648 = vmatpush1.xpose.msra.mxu0 0.0
        %1649 = vmatprep.subr.mxu0 0.0
        %1650 = vmatpush1.xpose.msra.mxu0 0.0
        %1651 = vmatprep.subr.mxu0 0.0
        %1652 = vmatpush1.xpose.msra.mxu0 0.0
        %1653 = vmatprep.subr.mxu0 0.0
        %1654 = vmatpush1.xpose.msra.mxu0 0.0
        %1655 = vmatprep.subr.mxu0 0.0
        %1656 = vmatpush1.xpose.msra.mxu0 0.0
        %1657 = vmatprep.subr.mxu0 0.0
        %1658 = vmatpush1.xpose.msra.mxu0 0.0
        %1659 = vmatprep.subr.mxu0 0.0
        %1660 = vmatpush1.xpose.msra.mxu0 0.0
        %1661 = vmatprep.subr.mxu0 0.0
        %1662 = vmatpush1.xpose.msra.mxu0 0.0
        %1663 = vmatprep.subr.mxu0 0.0
        %1664 = vmatpush1.xpose.msra.mxu0 0.0
        %1665 = vmatprep.subr.mxu0 0.0
        %1666 = vmatpush1.xpose.msra.mxu0 0.0
        %1667 = vmatprep.subr.mxu0 0.0
        %1668 = vmatpush1.xpose.msra.mxu0 0.0
        %1669 = vmatprep.subr.mxu0 0.0
        %1670 = vmatpush1.xpose.msra.mxu0 0.0
        %1671 = vmatprep.subr.mxu0 0.0
        %1672 = vmatpush1.xpose.msra.mxu0 0.0
        %1673 = vmatprep.subr.mxu0 0.0
        %1674 = vmatpush1.xpose.msra.mxu0 0.0
        %1675 = vmatprep.subr.mxu0 0.0
        %1676 = vmatpush1.xpose.msra.mxu0 0.0
        %1677 = vmatprep.mubr.f32.mxu0 0.0
        %1678 = vmatmul.mubr.f32.gmra.mrb[0].mxu0 %v1605
        %v1679 = vpop.f32.mrb[0].mxu0
        %v1680 = vadd.f32 0.0, %v1679
        %v1681 = vpop.f32.mrb[0].mxu0
        %1682 = vdwg.mxu0
        %v1684 = vsel %vm1524, %v1506, 0
        %v1687 = vsel %vm1524, %v1512, 0
        %v1690 = vsel %vm1524, %v1513, 0
        %1692 = vmatprep.subr.mxu0 0.0
        %1693 = vmatpush1.xpose.msra.mxu0 %v1687
        %1694 = vmatprep.subr.mxu0 0.0
        %1695 = vmatpush1.xpose.msra.mxu0 %v1690
        %1696 = vmatprep.subr.mxu0 0.0
        %1697 = vmatpush1.xpose.msra.mxu0 0.0
        %1698 = vmatprep.subr.mxu0 0.0
        %1699 = vmatpush1.xpose.msra.mxu0 0.0
        %1700 = vmatprep.subr.mxu0 0.0
        %1701 = vmatpush1.xpose.msra.mxu0 0.0
        %1702 = vmatprep.subr.mxu0 0.0
        %1703 = vmatpush1.xpose.msra.mxu0 0.0
        %1704 = vmatprep.subr.mxu0 0.0
        %1705 = vmatpush1.xpose.msra.mxu0 0.0
        %1706 = vmatprep.subr.mxu0 0.0
        %1707 = vmatpush1.xpose.msra.mxu0 0.0
        %1708 = vmatprep.subr.mxu0 0.0
        %1709 = vmatpush1.xpose.msra.mxu0 0.0
        %1710 = vmatprep.subr.mxu0 0.0
        %1711 = vmatpush1.xpose.msra.mxu0 0.0
        %1712 = vmatprep.subr.mxu0 0.0
        %1713 = vmatpush1.xpose.msra.mxu0 0.0
        %1714 = vmatprep.subr.mxu0 0.0
        %1715 = vmatpush1.xpose.msra.mxu0 0.0
        %1716 = vmatprep.subr.mxu0 0.0
        %1717 = vmatpush1.xpose.msra.mxu0 0.0
        %1718 = vmatprep.subr.mxu0 0.0
        %1719 = vmatpush1.xpose.msra.mxu0 0.0
        %1720 = vmatprep.subr.mxu0 0.0
        %1721 = vmatpush1.xpose.msra.mxu0 0.0
        %1722 = vmatprep.subr.mxu0 0.0
        %1723 = vmatpush1.xpose.msra.mxu0 0.0
        %1724 = vmatprep.subr.mxu0 0.0
        %1725 = vmatpush1.xpose.msra.mxu0 0.0
        %1726 = vmatprep.subr.mxu0 0.0
        %1727 = vmatpush1.xpose.msra.mxu0 0.0
        %1728 = vmatprep.subr.mxu0 0.0
        %1729 = vmatpush1.xpose.msra.mxu0 0.0
        %1730 = vmatprep.subr.mxu0 0.0
        %1731 = vmatpush1.xpose.msra.mxu0 0.0
        %1732 = vmatprep.subr.mxu0 0.0
        %1733 = vmatpush1.xpose.msra.mxu0 0.0
        %1734 = vmatprep.subr.mxu0 0.0
        %1735 = vmatpush1.xpose.msra.mxu0 0.0
        %1736 = vmatprep.subr.mxu0 0.0
        %1737 = vmatpush1.xpose.msra.mxu0 0.0
        %1738 = vmatprep.subr.mxu0 0.0
        %1739 = vmatpush1.xpose.msra.mxu0 0.0
        %1740 = vmatprep.subr.mxu0 0.0
        %1741 = vmatpush1.xpose.msra.mxu0 0.0
        %1742 = vmatprep.subr.mxu0 0.0
        %1743 = vmatpush1.xpose.msra.mxu0 0.0
        %1744 = vmatprep.subr.mxu0 0.0
        %1745 = vmatpush1.xpose.msra.mxu0 0.0
        %1746 = vmatprep.subr.mxu0 0.0
        %1747 = vmatpush1.xpose.msra.mxu0 0.0
        %1748 = vmatprep.subr.mxu0 0.0
        %1749 = vmatpush1.xpose.msra.mxu0 0.0
        %1750 = vmatprep.subr.mxu0 0.0
        %1751 = vmatpush1.xpose.msra.mxu0 0.0
        %1752 = vmatprep.subr.mxu0 0.0
        %1753 = vmatpush1.xpose.msra.mxu0 0.0
        %1754 = vmatprep.subr.mxu0 0.0
        %1755 = vmatpush1.xpose.msra.mxu0 0.0
        %1756 = vmatprep.mubr.f32.mxu0 0.0
        %1757 = vmatmul.mubr.f32.gmra.mrb[0].mxu0 %v1684
        %v1758 = vpop.f32.mrb[0].mxu0
        %v1759 = vadd.f32 0.0, %v1758
        %v1760 = vpop.f32.mrb[0].mxu0
        %1761 = vdwg.mxu0
        %v1763 = vsel %vm1524, %v1507, 0
        %v1766 = vsel %vm1524, %v1514, 0
        %v1769 = vsel %vm1524, %v1515, 0
        %1771 = vmatprep.subr.mxu0 0.0
        %1772 = vmatpush1.xpose.msra.mxu0 %v1766
        %1773 = vmatprep.subr.mxu0 0.0
        %1774 = vmatpush1.xpose.msra.mxu0 %v1769
        %1775 = vmatprep.subr.mxu0 0.0
        %1776 = vmatpush1.xpose.msra.mxu0 0.0
        %1777 = vmatprep.subr.mxu0 0.0
        %1778 = vmatpush1.xpose.msra.mxu0 0.0
        %1779 = vmatprep.subr.mxu0 0.0
        %1780 = vmatpush1.xpose.msra.mxu0 0.0
        %1781 = vmatprep.subr.mxu0 0.0
        %1782 = vmatpush1.xpose.msra.mxu0 0.0
        %1783 = vmatprep.subr.mxu0 0.0
        %1784 = vmatpush1.xpose.msra.mxu0 0.0
        %1785 = vmatprep.subr.mxu0 0.0
        %1786 = vmatpush1.xpose.msra.mxu0 0.0
        %1787 = vmatprep.subr.mxu0 0.0
        %1788 = vmatpush1.xpose.msra.mxu0 0.0
        %1789 = vmatprep.subr.mxu0 0.0
        %1790 = vmatpush1.xpose.msra.mxu0 0.0
        %1791 = vmatprep.subr.mxu0 0.0
        %1792 = vmatpush1.xpose.msra.mxu0 0.0
        %1793 = vmatprep.subr.mxu0 0.0
        %1794 = vmatpush1.xpose.msra.mxu0 0.0
        %1795 = vmatprep.subr.mxu0 0.0
        %1796 = vmatpush1.xpose.msra.mxu0 0.0
        %1797 = vmatprep.subr.mxu0 0.0
        %1798 = vmatpush1.xpose.msra.mxu0 0.0
        %1799 = vmatprep.subr.mxu0 0.0
        %1800 = vmatpush1.xpose.msra.mxu0 0.0
        %1801 = vmatprep.subr.mxu0 0.0
        %1802 = vmatpush1.xpose.msra.mxu0 0.0
        %1803 = vmatprep.subr.mxu0 0.0
        %1804 = vmatpush1.xpose.msra.mxu0 0.0
        %1805 = vmatprep.subr.mxu0 0.0
        %1806 = vmatpush1.xpose.msra.mxu0 0.0
        %1807 = vmatprep.subr.mxu0 0.0
        %1808 = vmatpush1.xpose.msra.mxu0 0.0
        %1809 = vmatprep.subr.mxu0 0.0
        %1810 = vmatpush1.xpose.msra.mxu0 0.0
        %1811 = vmatprep.subr.mxu0 0.0
        %1812 = vmatpush1.xpose.msra.mxu0 0.0
        %1813 = vmatprep.subr.mxu0 0.0
        %1814 = vmatpush1.xpose.msra.mxu0 0.0
        %1815 = vmatprep.subr.mxu0 0.0
        %1816 = vmatpush1.xpose.msra.mxu0 0.0
        %1817 = vmatprep.subr.mxu0 0.0
        %1818 = vmatpush1.xpose.msra.mxu0 0.0
        %1819 = vmatprep.subr.mxu0 0.0
        %1820 = vmatpush1.xpose.msra.mxu0 0.0
        %1821 = vmatprep.subr.mxu0 0.0
        %1822 = vmatpush1.xpose.msra.mxu0 0.0
        %1823 = vmatprep.subr.mxu0 0.0
        %1824 = vmatpush1.xpose.msra.mxu0 0.0
        %1825 = vmatprep.subr.mxu0 0.0
        %1826 = vmatpush1.xpose.msra.mxu0 0.0
        %1827 = vmatprep.subr.mxu0 0.0
        %1828 = vmatpush1.xpose.msra.mxu0 0.0
        %1829 = vmatprep.subr.mxu0 0.0
        %1830 = vmatpush1.xpose.msra.mxu0 0.0
        %1831 = vmatprep.subr.mxu0 0.0
        %1832 = vmatpush1.xpose.msra.mxu0 0.0
        %1833 = vmatprep.subr.mxu0 0.0
        %1834 = vmatpush1.xpose.msra.mxu0 0.0
        %1835 = vmatprep.mubr.f32.mxu0 0.0
        %1836 = vmatmul.mubr.f32.gmra.mrb[0].mxu0 %v1763
        %v1837 = vpop.f32.mrb[0].mxu0
        %v1838 = vadd.f32 0.0, %v1837
        %v1839 = vpop.f32.mrb[0].mxu0
        %1840 = vdwg.mxu0
        %vm1841 = vcmask 130048
        %v1842 = vsel %vm1841, %v1601, -inf
        %1843 = vmax.xlane.f32.xlu0 %v1842
        %v1844 = vpop.xlane.xlu0 %1843
        %v1845 = vsel %vm1841, %v1680, -inf
        %1846 = vmax.xlane.f32.xlu0 %v1845
        %v1847 = vpop.xlane.xlu0 %1846
        %v1848 = vsel %vm1841, %v1759, -inf
        %1849 = vmax.xlane.f32.xlu0 %v1848
        %v1850 = vpop.xlane.xlu0 %1849
        %v1851 = vsel %vm1841, %v1838, -inf
        %1852 = vmax.xlane.f32.xlu0 %v1851
        %v1853 = vpop.xlane.xlu0 %1852
        %v1854 = vsub.f32 %v1601, %v1844
        %v1855 = vsub.f32 %v1680, %v1847
        %v1856 = vsub.f32 %v1759, %v1850
        %v1857 = vsub.f32 %v1838, %v1853
        %v1858 = vmul.f32 %v1854, 1.442695
        %v1859 = vpow.pop %v1858
        %v1860 = vmul.f32 %v1855, 1.442695
        %v1861 = vpow.pop %v1860
        %v1862 = vmul.f32 %v1856, 1.442695
        %v1863 = vpow.pop %v1862
        %v1864 = vmul.f32 %v1857, 1.442695
        %v1865 = vpow.pop %v1864
        %v1866 = vsel %vm1841, %v1859, 0.0
        %1867 = vadd.xlane.f32.xlu0 %v1866
        %v1868 = vpop.xlane.xlu0 %1867
        %v1869 = vsel %vm1841, %v1861, 0.0
        %1870 = vadd.xlane.f32.xlu0 %v1869
        %v1871 = vpop.xlane.xlu0 %1870
        %v1872 = vsel %vm1841, %v1863, 0.0
        %1873 = vadd.xlane.f32.xlu0 %v1872
        %v1874 = vpop.xlane.xlu0 %1873
        %v1875 = vsel %vm1841, %v1865, 0.0
        %1876 = vadd.xlane.f32.xlu0 %v1875
        %v1877 = vpop.xlane.xlu0 %1876
        %v1878 = vrcp.pop %v1868
        %v1879 = vrcp.pop %v1871
        %v1880 = vrcp.pop %v1874
        %v1881 = vrcp.pop %v1877
        %v1882 = vmul.f32 %v1859, %v1878
        %v1883 = vmul.f32 %v1861, %v1879
        %v1884 = vmul.f32 %v1863, %v1880
        %v1885 = vmul.f32 %v1865, %v1881
        %v1887 = vsel %vm1841, %v1882, 0
        %1889 = vmatprep.subr.mxu0 0.0
        %1890 = vmatpush1.msra.mxu0 %v1516
        %1891 = vmatprep.subr.mxu0 0.0
        %1892 = vmatpush1.msra.mxu0 %v1517
        %1893 = vmatprep.subr.mxu0 0.0
        %1894 = vmatpush1.msra.mxu0 0.0
        %1895 = vmatprep.subr.mxu0 0.0
        %1896 = vmatpush1.msra.mxu0 0.0
        %1897 = vmatprep.subr.mxu0 0.0
        %1898 = vmatpush1.msra.mxu0 0.0
        %1899 = vmatprep.subr.mxu0 0.0
        %1900 = vmatpush1.msra.mxu0 0.0
        %1901 = vmatprep.subr.mxu0 0.0
        %1902 = vmatpush1.msra.mxu0 0.0
        %1903 = vmatprep.subr.mxu0 0.0
        %1904 = vmatpush1.msra.mxu0 0.0
        %1905 = vmatprep.subr.mxu0 0.0
        %1906 = vmatpush1.msra.mxu0 0.0
        %1907 = vmatprep.subr.mxu0 0.0
        %1908 = vmatpush1.msra.mxu0 0.0
        %1909 = vmatprep.subr.mxu0 0.0
        %1910 = vmatpush1.msra.mxu0 0.0
        %1911 = vmatprep.subr.mxu0 0.0
        %1912 = vmatpush1.msra.mxu0 0.0
        %1913 = vmatprep.subr.mxu0 0.0
        %1914 = vmatpush1.msra.mxu0 0.0
        %1915 = vmatprep.subr.mxu0 0.0
        %1916 = vmatpush1.msra.mxu0 0.0
        %1917 = vmatprep.subr.mxu0 0.0
        %1918 = vmatpush1.msra.mxu0 0.0
        %1919 = vmatprep.subr.mxu0 0.0
        %1920 = vmatpush1.msra.mxu0 0.0
        %1921 = vmatprep.subr.mxu0 0.0
        %1922 = vmatpush1.msra.mxu0 0.0
        %1923 = vmatprep.subr.mxu0 0.0
        %1924 = vmatpush1.msra.mxu0 0.0
        %1925 = vmatprep.subr.mxu0 0.0
        %1926 = vmatpush1.msra.mxu0 0.0
        %1927 = vmatprep.subr.mxu0 0.0
        %1928 = vmatpush1.msra.mxu0 0.0
        %1929 = vmatprep.subr.mxu0 0.0
        %1930 = vmatpush1.msra.mxu0 0.0
        %1931 = vmatprep.subr.mxu0 0.0
        %1932 = vmatpush1.msra.mxu0 0.0
        %1933 = vmatprep.subr.mxu0 0.0
        %1934 = vmatpush1.msra.mxu0 0.0
        %1935 = vmatprep.subr.mxu0 0.0
        %1936 = vmatpush1.msra.mxu0 0.0
        %1937 = vmatprep.subr.mxu0 0.0
        %1938 = vmatpush1.msra.mxu0 0.0
        %1939 = vmatprep.subr.mxu0 0.0
        %1940 = vmatpush1.msra.mxu0 0.0
        %1941 = vmatprep.subr.mxu0 0.0
        %1942 = vmatpush1.msra.mxu0 0.0
        %1943 = vmatprep.subr.mxu0 0.0
        %1944 = vmatpush1.msra.mxu0 0.0
        %1945 = vmatprep.subr.mxu0 0.0
        %1946 = vmatpush1.msra.mxu0 0.0
        %1947 = vmatprep.subr.mxu0 0.0
        %1948 = vmatpush1.msra.mxu0 0.0
        %1949 = vmatprep.subr.mxu0 0.0
        %1950 = vmatpush1.msra.mxu0 0.0
        %1951 = vmatprep.subr.mxu0 0.0
        %1952 = vmatpush1.msra.mxu0 0.0
        %1953 = vmatprep.mubr.f32.mxu0 0.0
        %1954 = vmatmul.mubr.f32.gmra.mrb[0].mxu0 %v1887
        %v1955 = vpop.f32.mrb[0].mxu0
        %v1956 = vadd.f32 0.0, %v1955
        %v1957 = vpop.f32.mrb[0].mxu0
        %1958 = vdwg.mxu0
        %v1960 = vsel %vm1841, %v1883, 0
        %1962 = vmatprep.subr.mxu0 0.0
        %1963 = vmatpush1.msra.mxu0 %v1518
        %1964 = vmatprep.subr.mxu0 0.0
        %1965 = vmatpush1.msra.mxu0 %v1519
        %1966 = vmatprep.subr.mxu0 0.0
        %1967 = vmatpush1.msra.mxu0 0.0
        %1968 = vmatprep.subr.mxu0 0.0
        %1969 = vmatpush1.msra.mxu0 0.0
        %1970 = vmatprep.subr.mxu0 0.0
        %1971 = vmatpush1.msra.mxu0 0.0
        %1972 = vmatprep.subr.mxu0 0.0
        %1973 = vmatpush1.msra.mxu0 0.0
        %1974 = vmatprep.subr.mxu0 0.0
        %1975 = vmatpush1.msra.mxu0 0.0
        %1976 = vmatprep.subr.mxu0 0.0
        %1977 = vmatpush1.msra.mxu0 0.0
        %1978 = vmatprep.subr.mxu0 0.0
        %1979 = vmatpush1.msra.mxu0 0.0
        %1980 = vmatprep.subr.mxu0 0.0
        %1981 = vmatpush1.msra.mxu0 0.0
        %1982 = vmatprep.subr.mxu0 0.0
        %1983 = vmatpush1.msra.mxu0 0.0
        %1984 = vmatprep.subr.mxu0 0.0
        %1985 = vmatpush1.msra.mxu0 0.0
        %1986 = vmatprep.subr.mxu0 0.0
        %1987 = vmatpush1.msra.mxu0 0.0
        %1988 = vmatprep.subr.mxu0 0.0
        %1989 = vmatpush1.msra.mxu0 0.0
        %1990 = vmatprep.subr.mxu0 0.0
        %1991 = vmatpush1.msra.mxu0 0.0
        %1992 = vmatprep.subr.mxu0 0.0
        %1993 = vmatpush1.msra.mxu0 0.0
        %1994 = vmatprep.subr.mxu0 0.0
        %1995 = vmatpush1.msra.mxu0 0.0
        %1996 = vmatprep.subr.mxu0 0.0
        %1997 = vmatpush1.msra.mxu0 0.0
        %1998 = vmatprep.subr.mxu0 0.0
        %1999 = vmatpush1.msra.mxu0 0.0
        %2000 = vmatprep.subr.mxu0 0.0
        %2001 = vmatpush1.msra.mxu0 0.0
        %2002 = vmatprep.subr.mxu0 0.0
        %2003 = vmatpush1.msra.mxu0 0.0
        %2004 = vmatprep.subr.mxu0 0.0
        %2005 = vmatpush1.msra.mxu0 0.0
        %2006 = vmatprep.subr.mxu0 0.0
        %2007 = vmatpush1.msra.mxu0 0.0
        %2008 = vmatprep.subr.mxu0 0.0
        %2009 = vmatpush1.msra.mxu0 0.0
        %2010 = vmatprep.subr.mxu0 0.0
        %2011 = vmatpush1.msra.mxu0 0.0
        %2012 = vmatprep.subr.mxu0 0.0
        %2013 = vmatpush1.msra.mxu0 0.0
        %2014 = vmatprep.subr.mxu0 0.0
        %2015 = vmatpush1.msra.mxu0 0.0
        %2016 = vmatprep.subr.mxu0 0.0
        %2017 = vmatpush1.msra.mxu0 0.0
        %2018 = vmatprep.subr.mxu0 0.0
        %2019 = vmatpush1.msra.mxu0 0.0
        %2020 = vmatprep.subr.mxu0 0.0
        %2021 = vmatpush1.msra.mxu0 0.0
        %2022 = vmatprep.subr.mxu0 0.0
        %2023 = vmatpush1.msra.mxu0 0.0
        %2024 = vmatprep.subr.mxu0 0.0
        %2025 = vmatpush1.msra.mxu0 0.0
        %2026 = vmatprep.mubr.f32.mxu0 0.0
        %2027 = vmatmul.mubr.f32.gmra.mrb[0].mxu0 %v1960
        %v2028 = vpop.f32.mrb[0].mxu0
        %v2029 = vadd.f32 0.0, %v2028
        %v2030 = vpop.f32.mrb[0].mxu0
        %2031 = vdwg.mxu0
        %v2033 = vsel %vm1841, %v1884, 0
        %2035 = vmatprep.subr.mxu0 0.0
        %2036 = vmatpush1.msra.mxu0 %v1520
        %2037 = vmatprep.subr.mxu0 0.0
        %2038 = vmatpush1.msra.mxu0 %v1521
        %2039 = vmatprep.subr.mxu0 0.0
        %2040 = vmatpush1.msra.mxu0 0.0
        %2041 = vmatprep.subr.mxu0 0.0
        %2042 = vmatpush1.msra.mxu0 0.0
        %2043 = vmatprep.subr.mxu0 0.0
        %2044 = vmatpush1.msra.mxu0 0.0
        %2045 = vmatprep.subr.mxu0 0.0
        %2046 = vmatpush1.msra.mxu0 0.0
        %2047 = vmatprep.subr.mxu0 0.0
        %2048 = vmatpush1.msra.mxu0 0.0
        %2049 = vmatprep.subr.mxu0 0.0
        %2050 = vmatpush1.msra.mxu0 0.0
        %2051 = vmatprep.subr.mxu0 0.0
        %2052 = vmatpush1.msra.mxu0 0.0
        %2053 = vmatprep.subr.mxu0 0.0
        %2054 = vmatpush1.msra.mxu0 0.0
        %2055 = vmatprep.subr.mxu0 0.0
        %2056 = vmatpush1.msra.mxu0 0.0
        %2057 = vmatprep.subr.mxu0 0.0
        %2058 = vmatpush1.msra.mxu0 0.0
        %2059 = vmatprep.subr.mxu0 0.0
        %2060 = vmatpush1.msra.mxu0 0.0
        %2061 = vmatprep.subr.mxu0 0.0
        %2062 = vmatpush1.msra.mxu0 0.0
        %2063 = vmatprep.subr.mxu0 0.0
        %2064 = vmatpush1.msra.mxu0 0.0
        %2065 = vmatprep.subr.mxu0 0.0
        %2066 = vmatpush1.msra.mxu0 0.0
        %2067 = vmatprep.subr.mxu0 0.0
        %2068 = vmatpush1.msra.mxu0 0.0
        %2069 = vmatprep.subr.mxu0 0.0
        %2070 = vmatpush1.msra.mxu0 0.0
        %2071 = vmatprep.subr.mxu0 0.0
        %2072 = vmatpush1.msra.mxu0 0.0
        %2073 = vmatprep.subr.mxu0 0.0
        %2074 = vmatpush1.msra.mxu0 0.0
        %2075 = vmatprep.subr.mxu0 0.0
        %2076 = vmatpush1.msra.mxu0 0.0
        %2077 = vmatprep.subr.mxu0 0.0
        %2078 = vmatpush1.msra.mxu0 0.0
        %2079 = vmatprep.subr.mxu0 0.0
        %2080 = vmatpush1.msra.mxu0 0.0
        %2081 = vmatprep.subr.mxu0 0.0
        %2082 = vmatpush1.msra.mxu0 0.0
        %2083 = vmatprep.subr.mxu0 0.0
        %2084 = vmatpush1.msra.mxu0 0.0
        %2085 = vmatprep.subr.mxu0 0.0
        %2086 = vmatpush1.msra.mxu0 0.0
        %2087 = vmatprep.subr.mxu0 0.0
        %2088 = vmatpush1.msra.mxu0 0.0
        %2089 = vmatprep.subr.mxu0 0.0
        %2090 = vmatpush1.msra.mxu0 0.0
        %2091 = vmatprep.subr.mxu0 0.0
        %2092 = vmatpush1.msra.mxu0 0.0
        %2093 = vmatprep.subr.mxu0 0.0
        %2094 = vmatpush1.msra.mxu0 0.0
        %2095 = vmatprep.subr.mxu0 0.0
        %2096 = vmatpush1.msra.mxu0 0.0
        %2097 = vmatprep.subr.mxu0 0.0
        %2098 = vmatpush1.msra.mxu0 0.0
        %2099 = vmatprep.mubr.f32.mxu0 0.0
        %2100 = vmatmul.mubr.f32.gmra.mrb[0].mxu0 %v2033
        %v2101 = vpop.f32.mrb[0].mxu0
        %v2102 = vadd.f32 0.0, %v2101
        %v2103 = vpop.f32.mrb[0].mxu0
        %2104 = vdwg.mxu0
        %v2106 = vsel %vm1841, %v1885, 0
        %2108 = vmatprep.subr.mxu0 0.0
        %2109 = vmatpush1.msra.mxu0 %v1522
        %2110 = vmatprep.subr.mxu0 0.0
        %2111 = vmatpush1.msra.mxu0 %v1523
        %2112 = vmatprep.subr.mxu0 0.0
        %2113 = vmatpush1.msra.mxu0 0.0
        %2114 = vmatprep.subr.mxu0 0.0
        %2115 = vmatpush1.msra.mxu0 0.0
        %2116 = vmatprep.subr.mxu0 0.0
        %2117 = vmatpush1.msra.mxu0 0.0
        %2118 = vmatprep.subr.mxu0 0.0
        %2119 = vmatpush1.msra.mxu0 0.0
        %2120 = vmatprep.subr.mxu0 0.0
        %2121 = vmatpush1.msra.mxu0 0.0
        %2122 = vmatprep.subr.mxu0 0.0
        %2123 = vmatpush1.msra.mxu0 0.0
        %2124 = vmatprep.subr.mxu0 0.0
        %2125 = vmatpush1.msra.mxu0 0.0
        %2126 = vmatprep.subr.mxu0 0.0
        %2127 = vmatpush1.msra.mxu0 0.0
        %2128 = vmatprep.subr.mxu0 0.0
        %2129 = vmatpush1.msra.mxu0 0.0
        %2130 = vmatprep.subr.mxu0 0.0
        %2131 = vmatpush1.msra.mxu0 0.0
        %2132 = vmatprep.subr.mxu0 0.0
        %2133 = vmatpush1.msra.mxu0 0.0
        %2134 = vmatprep.subr.mxu0 0.0
        %2135 = vmatpush1.msra.mxu0 0.0
        %2136 = vmatprep.subr.mxu0 0.0
        %2137 = vmatpush1.msra.mxu0 0.0
        %2138 = vmatprep.subr.mxu0 0.0
        %2139 = vmatpush1.msra.mxu0 0.0
        %2140 = vmatprep.subr.mxu0 0.0
        %2141 = vmatpush1.msra.mxu0 0.0
        %2142 = vmatprep.subr.mxu0 0.0
        %2143 = vmatpush1.msra.mxu0 0.0
        %2144 = vmatprep.subr.mxu0 0.0
        %2145 = vmatpush1.msra.mxu0 0.0
        %2146 = vmatprep.subr.mxu0 0.0
        %2147 = vmatpush1.msra.mxu0 0.0
        %2148 = vmatprep.subr.mxu0 0.0
        %2149 = vmatpush1.msra.mxu0 0.0
        %2150 = vmatprep.subr.mxu0 0.0
        %2151 = vmatpush1.msra.mxu0 0.0
        %2152 = vmatprep.subr.mxu0 0.0
        %2153 = vmatpush1.msra.mxu0 0.0
        %2154 = vmatprep.subr.mxu0 0.0
        %2155 = vmatpush1.msra.mxu0 0.0
        %2156 = vmatprep.subr.mxu0 0.0
        %2157 = vmatpush1.msra.mxu0 0.0
        %2158 = vmatprep.subr.mxu0 0.0
        %2159 = vmatpush1.msra.mxu0 0.0
        %2160 = vmatprep.subr.mxu0 0.0
        %2161 = vmatpush1.msra.mxu0 0.0
        %2162 = vmatprep.subr.mxu0 0.0
        %2163 = vmatpush1.msra.mxu0 0.0
        %2164 = vmatprep.subr.mxu0 0.0
        %2165 = vmatpush1.msra.mxu0 0.0
        %2166 = vmatprep.subr.mxu0 0.0
        %2167 = vmatpush1.msra.mxu0 0.0
        %2168 = vmatprep.subr.mxu0 0.0
        %2169 = vmatpush1.msra.mxu0 0.0
        %2170 = vmatprep.subr.mxu0 0.0
        %2171 = vmatpush1.msra.mxu0 0.0
        %2172 = vmatprep.mubr.f32.mxu0 0.0
        %2173 = vmatmul.mubr.f32.gmra.mrb[0].mxu0 %v2106
        %v2174 = vpop.f32.mrb[0].mxu0
        %v2175 = vadd.f32 0.0, %v2174
        %v2176 = vpop.f32.mrb[0].mxu0
        %2177 = vdwg.mxu0
        %v2178 = vcombine.low %v1956, %v2102
        %v2179 = vcombine.high %v1956, %v2102
        %v2181 = vunpack.c.l.s4 1983009808
        %v2182 = vunpack.c.0.s8 %v2181
        %v2183 = vlaneseq
        %v2184 = vshrl.u32 %v2183, 7
        %v2185 = vsub.s32 %v2182, %v2184
        %v2186 = vrot.slane %v2178, %v2185
        %v2188 = vunpack.c.l.s4 1983009808
        %v2189 = vunpack.c.0.s8 %v2188
        %v2190 = vlaneseq
        %v2191 = vshrl.u32 %v2190, 7
        %v2192 = vsub.s32 %v2189, %v2191
        %v2193 = vrot.slane %v2179, %v2192
        %v2194 = vcombine.low %v2029, %v2175
        %v2195 = vcombine.high %v2029, %v2175
        %v2197 = vunpack.c.l.s4 1983009808
        %v2198 = vunpack.c.0.s8 %v2197
        %v2199 = vlaneseq
        %v2200 = vshrl.u32 %v2199, 7
        %v2201 = vsub.s32 %v2198, %v2200
        %v2202 = vrot.slane %v2194, %v2201
        %v2204 = vunpack.c.l.s4 1983009808
        %v2205 = vunpack.c.0.s8 %v2204
        %v2206 = vlaneseq
        %v2207 = vshrl.u32 %v2206, 7
        %v2208 = vsub.s32 %v2205, %v2207
        %v2209 = vrot.slane %v2195, %v2208
        %v2210 = vcombine.low %v2186, %v2202
        %v2211 = vcombine.high %v2186, %v2202
        %v2213 = vunpack.c.l.s4 1934713408
        %v2214 = vunpack.c.0.s8 %v2213
        %v2215 = vlaneseq
        %v2216 = vshrl.u32 %v2215, 7
        %v2217 = vsub.s32 %v2214, %v2216
        %v2218 = vrot.slane %v2210, %v2217
        %v2220 = vunpack.c.l.s4 1934713408
        %v2221 = vunpack.c.0.s8 %v2220
        %v2222 = vlaneseq
        %v2223 = vshrl.u32 %v2222, 7
        %v2224 = vsub.s32 %v2221, %v2223
        %v2225 = vrot.slane %v2211, %v2224
        %v2226 = vcombine.low %v2193, %v2209
        %v2227 = vcombine.high %v2193, %v2209
        %v2229 = vunpack.c.l.s4 1934713408
        %v2230 = vunpack.c.0.s8 %v2229
        %v2231 = vlaneseq
        %v2232 = vshrl.u32 %v2231, 7
        %v2233 = vsub.s32 %v2230, %v2232
        %v2234 = vrot.slane %v2226, %v2233
        %v2236 = vunpack.c.l.s4 1934713408
        %v2237 = vunpack.c.0.s8 %v2236
        %v2238 = vlaneseq
        %v2239 = vshrl.u32 %v2238, 7
        %v2240 = vsub.s32 %v2237, %v2239
        %v2241 = vrot.slane %v2227, %v2240
        %v2242 = vcombine.high %v2218, 0.0
        %v2243 = vcombine.high %v2225, 0.0
        %v2244 = vcombine.high %v2234, 0.0
        %v2245 = vcombine.high %v2241, 0.0
        %v2246 = vcombine.low %v2218, %v2225
        %v2248 = vunpack.c.l.s4 1983009808
        %v2249 = vunpack.c.0.s8 %v2248
        %v2250 = vlaneseq
        %v2251 = vshrl.u32 %v2250, 7
        %v2252 = vsub.s32 %v2249, %v2251
        %v2253 = vrot.slane %v2246, %v2252
        %v2254 = vcombine.low %v2242, %v2243
        %v2256 = vunpack.c.l.s4 1983009808
        %v2257 = vunpack.c.0.s8 %v2256
        %v2258 = vlaneseq
        %v2259 = vshrl.u32 %v2258, 7
        %v2260 = vsub.s32 %v2257, %v2259
        %v2261 = vrot.slane %v2254, %v2260
        %v2262 = vcombine.low %v2234, %v2241
        %v2264 = vunpack.c.l.s4 1983009808
        %v2265 = vunpack.c.0.s8 %v2264
        %v2266 = vlaneseq
        %v2267 = vshrl.u32 %v2266, 7
        %v2268 = vsub.s32 %v2265, %v2267
        %v2269 = vrot.slane %v2262, %v2268
        %v2270 = vcombine.low %v2244, %v2245
        %v2272 = vunpack.c.l.s4 1983009808
        %v2273 = vunpack.c.0.s8 %v2272
        %v2274 = vlaneseq
        %v2275 = vshrl.u32 %v2274, 7
        %v2276 = vsub.s32 %v2273, %v2275
        %v2277 = vrot.slane %v2270, %v2276
        %v2278 = vcombine.low %v2253, %v2261
        %v2279 = vcombine.high %v2253, %v2261
        %v2281 = vunpack.c.l.s4 1934713408
        %v2282 = vunpack.c.0.s8 %v2281
        %v2283 = vlaneseq
        %v2284 = vshrl.u32 %v2283, 7
        %v2285 = vsub.s32 %v2282, %v2284
        %v2286 = vrot.slane %v2278, %v2285
        %v2288 = vunpack.c.l.s4 1934713408
        %v2289 = vunpack.c.0.s8 %v2288
        %v2290 = vlaneseq
        %v2291 = vshrl.u32 %v2290, 7
        %v2292 = vsub.s32 %v2289, %v2291
        %v2293 = vrot.slane %v2279, %v2292
        %v2294 = vcombine.low %v2269, %v2277
        %v2295 = vcombine.high %v2269, %v2277
        %v2297 = vunpack.c.l.s4 1934713408
        %v2298 = vunpack.c.0.s8 %v2297
        %v2299 = vlaneseq
        %v2300 = vshrl.u32 %v2299, 7
        %v2301 = vsub.s32 %v2298, %v2300
        %v2302 = vrot.slane %v2294, %v2301
        %v2304 = vunpack.c.l.s4 1934713408
        %v2305 = vunpack.c.0.s8 %v2304
        %v2306 = vlaneseq
        %v2307 = vshrl.u32 %v2306, 7
        %v2308 = vsub.s32 %v2305, %v2307
        %v2309 = vrot.slane %v2295, %v2308
        %v2310 = vcombine.low %v2286, %v2302
        %v2311 = vcombine.high %v2286, %v2302
        %v2312 = vcombine.low %v2293, %v2309
        %v2313 = vcombine.high %v2293, %v2309
        %2315 = vrot.lane.b32.xlu0 %v2311, 8
        %v2316 = vpop.permute.xlu0 %2315
        %2319 = vrot.lane.b32.xlu0 %v2312, 16
        %v2320 = vpop.permute.xlu0 %2319
        %2323 = vrot.lane.b32.xlu0 %v2313, 24
        %v2324 = vpop.permute.xlu0 %2323
        %v2326 = vsel %vm1524, %v2310, %v2316
        %v2327 = vsel %vm1841, %v2326, %v2320
        %vm2328 = vcmask 195584
        %v2329 = vsel %vm2328, %v2327, %v2324
        %v2330 = vld [vmem:[#allocation13] sm:$0xff]
        %v2331 = vld [vmem:[#allocation13 + $0x8] sm:$0xff]
        %v2332 = vld [vmem:[#allocation13 + $0x10] sm:$0xff]
        %v2333 = vld [vmem:[#allocation13 + $0x18] sm:$0xff]
        %v2334 = vld [vmem:[%s9] sm:$0x1]
        %v2336 = vlaneseq
        %v2337 = vshrl.u32 %v2336, 7
        %v2338 = vsub.s32 0, %v2337
        %v2339 = vrot.slane %v2334, %v2338
        %v2342 = vsel %vm1288, %v2329, 0
        %2344 = vmatprep.subr.mxu0 0.0
        %2345 = vmatpush1.msra.mxu0 %v2330
        %2346 = vmatprep.subr.mxu0 0.0
        %2347 = vmatpush1.msra.mxu0 %v2331
        %2348 = vmatprep.subr.mxu0 0.0
        %2349 = vmatpush1.msra.mxu0 %v2332
        %2350 = vmatprep.subr.mxu0 0.0
        %2351 = vmatpush1.msra.mxu0 %v2333
        %2352 = vmatprep.subr.mxu0 0.0
        %2353 = vmatpush1.msra.mxu0 0.0
        %2354 = vmatprep.subr.mxu0 0.0
        %2355 = vmatpush1.msra.mxu0 0.0
        %2356 = vmatprep.subr.mxu0 0.0
        %2357 = vmatpush1.msra.mxu0 0.0
        %2358 = vmatprep.subr.mxu0 0.0
        %2359 = vmatpush1.msra.mxu0 0.0
        %2360 = vmatprep.subr.mxu0 0.0
        %2361 = vmatpush1.msra.mxu0 0.0
        %2362 = vmatprep.subr.mxu0 0.0
        %2363 = vmatpush1.msra.mxu0 0.0
        %2364 = vmatprep.subr.mxu0 0.0
        %2365 = vmatpush1.msra.mxu0 0.0
        %2366 = vmatprep.subr.mxu0 0.0
        %2367 = vmatpush1.msra.mxu0 0.0
        %2368 = vmatprep.subr.mxu0 0.0
        %2369 = vmatpush1.msra.mxu0 0.0
        %2370 = vmatprep.subr.mxu0 0.0
        %2371 = vmatpush1.msra.mxu0 0.0
        %2372 = vmatprep.subr.mxu0 0.0
        %2373 = vmatpush1.msra.mxu0 0.0
        %2374 = vmatprep.subr.mxu0 0.0
        %2375 = vmatpush1.msra.mxu0 0.0
        %2376 = vmatprep.subr.mxu0 0.0
        %2377 = vmatpush1.msra.mxu0 0.0
        %2378 = vmatprep.subr.mxu0 0.0
        %2379 = vmatpush1.msra.mxu0 0.0
        %2380 = vmatprep.subr.mxu0 0.0
        %2381 = vmatpush1.msra.mxu0 0.0
        %2382 = vmatprep.subr.mxu0 0.0
        %2383 = vmatpush1.msra.mxu0 0.0
        %2384 = vmatprep.subr.mxu0 0.0
        %2385 = vmatpush1.msra.mxu0 0.0
        %2386 = vmatprep.subr.mxu0 0.0
        %2387 = vmatpush1.msra.mxu0 0.0
        %2388 = vmatprep.subr.mxu0 0.0
        %2389 = vmatpush1.msra.mxu0 0.0
        %2390 = vmatprep.subr.mxu0 0.0
        %2391 = vmatpush1.msra.mxu0 0.0
        %2392 = vmatprep.subr.mxu0 0.0
        %2393 = vmatpush1.msra.mxu0 0.0
        %2394 = vmatprep.subr.mxu0 0.0
        %2395 = vmatpush1.msra.mxu0 0.0
        %2396 = vmatprep.subr.mxu0 0.0
        %2397 = vmatpush1.msra.mxu0 0.0
        %2398 = vmatprep.subr.mxu0 0.0
        %2399 = vmatpush1.msra.mxu0 0.0
        %2400 = vmatprep.subr.mxu0 0.0
        %2401 = vmatpush1.msra.mxu0 0.0
        %2402 = vmatprep.subr.mxu0 0.0
        %2403 = vmatpush1.msra.mxu0 0.0
        %2404 = vmatprep.subr.mxu0 0.0
        %2405 = vmatpush1.msra.mxu0 0.0
        %2406 = vmatprep.subr.mxu0 0.0
        %2407 = vmatpush1.msra.mxu0 0.0
        %2408 = vmatprep.mubr.f32.mxu0 0.0
        %2409 = vmatmul.mubr.f32.gmra.mrb[0].mxu0 %v2342
        %v2410 = vpop.f32.mrb[0].mxu0
        %v2411 = vadd.f32 %v2339, %v2410
        %v2412 = vpop.f32.mrb[0].mxu0
        %2413 = vdwg.mxu0
        %2414 = vst.msk [vmem:[%s489] sm:$0xff] %vm1288, %v2411
        %s2415 = sand.u32 %s276, 1
        %s2416 = scalar_lea.sflag [#allocation6], %s2415
        %s2417 = sand.u32 %s276, 1
        %s2418 = smul.addr %s2417, 8
        %s2419 = scalar_lea.vmem [#allocation15], %s2418
        // Predicated region
        $region89: #{tpu_custom_call.1} parent=59 // pred_check
          %p2420 = pneg %p286
        $region90: #{tpu_custom_call.1} parent=59 // pred_check_branch
          %2422 = sbr.rel (%p2420) target = $region92
        $region91: #{tpu_custom_call.1} parent=59 // pred_region
          %s2424 = ssub.s32 128, 128
          %2425 = vsyncadd %s2416, %s2424
          %s2426 = sadd.s32 %s37, %s36
          %s2427 = smul.addr %s2426, 128
          %s2428 = scalar_lea.hbm %s10, %s2427
          %s2430 = sshll.u32 %s2419, 4
          %s2431 = int_to_ptr.vmem [resolvable:$true] %s2430
          %2433 = dma.vmem_to_hbm [thread:$0]  %s2431, 128, %s2428, %s2416
        $region92: #{tpu_custom_call.1} parent=59 // pred_fallthru
          _
      $region60: #{tpu_custom_call.1} parent=5 // pred_fallthru
        _
      %p2434 = scmp.le.s32.totalorder 2, %s27
      // Predicated region
      $region93: #{tpu_custom_call.1} parent=5 // pred_check
        %p2435 = pneg %p2434
      $region94: #{tpu_custom_call.1} parent=5 // pred_check_branch
        %2437 = sbr.rel (%p2435) target = $region96
      $region95: #{tpu_custom_call.1} parent=5 // pred_region
        %s2438 = ssub.s32 %s27, 2
        // Predicated region
        $region97: #{tpu_custom_call.1} parent=95 // pred_check
          %p2439 = pneg %p292
        $region98: #{tpu_custom_call.1} parent=95 // pred_check_branch
          %2441 = sbr.rel (%p2439) target = $region100
        $region99: #{tpu_custom_call.1} parent=95 // pred_region
          %s2442 = sand.u32 %s277, 1
          %s2443 = scalar_lea.sflag [#allocation6], %s2442
          %s2444 = sand.u32 %s277, 1
          %s2445 = smul.addr %s2444, 8
          %s2446 = scalar_lea.vmem [#allocation15], %s2445
          %2447 = dma.done %s2443, 128
        $region100: #{tpu_custom_call.1} parent=95 // pred_fallthru
          _
      $region96: #{tpu_custom_call.1} parent=5 // pred_fallthru
        _
    $region6: #{tpu_custom_call.1} parent=1 // loop_footer
      %s31 = sadd.s32 1, %s27
    $region7: #{tpu_custom_call.1} parent=1 // loop_footer_branch
      %26 = sbr.rel target = $region3
    $region8: #{tpu_custom_call.1} parent=1 // loop_exit
      _
    %2448 = vsyncpa [#allocation5], 1
    %s2449 = scalar_lea.sflag [#allocation5], 1
    %2450 = vsyncpa %s2449, 1
    %2451 = vsyncpa [#allocation8], 1
    %s2452 = scalar_lea.sflag [#allocation8], 1
    %2453 = vsyncpa %s2452, 1
    %2454 = vsyncpa [#allocation11], 1
    %2455 = vsyncpa [#allocation14], 1
    %2456 = vsyncpa [#allocation6], 1
    %s2457 = scalar_lea.sflag [#allocation6], 1
    %2458 = vsyncpa %s2457, 1

</llo_original>
